<compile_context>
chip_gen: v5e
topology: v5e:2x2
jax: 0.10.0
libtpu: 0.0.40
codegen_flags: <defaults>
</compile_context>

<pallas_src>
import numpy as np
import jax
import jax.numpy as jnp
from jax.experimental import pallas as pl
from jax.experimental.pallas import tpu as pltpu


def _lstm_recurrence_kernel(gx_ref, whh_ref, y_ref, c_out_ref, h_sc, c_sc):
    """Sequential LSTM recurrence over one time chunk.

    grid = (batch_tiles, time_chunks); axis 0 "parallel", axis 1 "arbitrary".
      gx_ref  : (T_chunk, B_tile, 4H) f32   precomputed x @ W_ih + b
      whh_ref : (H, 4H)               bf16  recurrent weights
      y_ref   : (T_chunk, B_tile, H)  f32   per-timestep hidden output
      c_out   : (B_tile, H)           f32   final cell state (written at last chunk)
      h_sc/c_sc: (B_tile, H) f32 VMEM scratch carried across time chunks.
    """
    tc = pl.program_id(1)
    H = h_sc.shape[-1]
    T = gx_ref.shape[0]

    @pl.when(tc == 0)
    def _():
        h_sc[...] = jnp.zeros_like(h_sc)
        c_sc[...] = jnp.zeros_like(c_sc)

    def step(t, carry):
        h_prev, c_prev = carry
        # Only the recurrent projection is inside the serial loop:
        # (B, H) x (H, 4H) on the MXU, bf16 operands / f32 accumulation.
        gates = gx_ref[t] + jnp.dot(
            h_prev.astype(whh_ref.dtype), whh_ref[...],
            preferred_element_type=jnp.float32)                  # (B_tile, 4H)
        # PyTorch gate order: i, f, g, o. H is a multiple of 128 in real configs
        # so each slice is lane-dense.
        i = jax.nn.sigmoid(gates[:, 0 * H:1 * H])
        f = jax.nn.sigmoid(gates[:, 1 * H:2 * H])
        g = jnp.tanh(gates[:, 2 * H:3 * H])
        o = jax.nn.sigmoid(gates[:, 3 * H:4 * H])
        c = f * c_prev + i * g
        h = o * jnp.tanh(c)
        y_ref[t] = h.astype(y_ref.dtype)
        return h, c

    # Carry (h, c) in registers across the (unrolled) chunk; spill to VMEM scratch
    # only at chunk boundaries so the state survives across grid steps.
    h_f, c_f = jax.lax.fori_loop(0, T, step, (h_sc[...], c_sc[...]), unroll=True)
    h_sc[...] = h_f
    c_sc[...] = c_f

    @pl.when(tc == pl.num_programs(1) - 1)
    def _():
        c_out_ref[...] = c_f.astype(c_out_ref.dtype)


def _largest_divisor_at_most(n, target):
    for d in range(min(n, target), 0, -1):
        if n % d == 0:
            return d
    return 1


def lstm_layer(x, w_ih, w_hh, b, *, compute_dtype=jnp.bfloat16,
               time_chunk_target=16):
    """One LSTM layer.

    x: (S, B, IN) f32; w_ih: (IN, 4H); w_hh: (H, 4H); b: (1, 4H) (= b_ih + b_hh).
    Returns (y, c_final): y (S, B, H) f32 full sequence output, c_final (B, H) f32.
    """
    S, B, IN = x.shape
    H = w_hh.shape[0]

    # --- Hoisted input projection: one big MXU-friendly matmul over the whole
    # sequence (M = S*B), bf16 in / f32 accumulate. Only h @ W_hh is sequential.
    gx = jnp.einsum(
        "sbi,ij->sbj",
        x.astype(compute_dtype), w_ih.astype(compute_dtype),
        preferred_element_type=jnp.float32,
    ) + b                                                        # (S, B, 4H) f32

    t_chunk = _largest_divisor_at_most(S, time_chunk_target)
    b_tile = B   # TODO(synk): split batch into >=8-row tiles for v7x dual-TC use.
    grid = (B // b_tile, S // t_chunk)

    grid_spec = pltpu.PrefetchScalarGridSpec(
        num_scalar_prefetch=0,
        grid=grid,
        in_specs=[
            pl.BlockSpec((t_chunk, b_tile, 4 * H), lambda bi, ti: (ti, bi, 0)),
            pl.BlockSpec((H, 4 * H), lambda bi, ti: (0, 0)),
        ],
        out_specs=[
            pl.BlockSpec((t_chunk, b_tile, H), lambda bi, ti: (ti, bi, 0)),
            pl.BlockSpec((b_tile, H), lambda bi, ti: (bi, 0)),
        ],
        scratch_shapes=[
            pltpu.VMEM((b_tile, H), jnp.float32),
            pltpu.VMEM((b_tile, H), jnp.float32),
        ],
    )
    y, c_f = pl.pallas_call(
        _lstm_recurrence_kernel,
        out_shape=(
            jax.ShapeDtypeStruct((S, B, H), jnp.float32),
            jax.ShapeDtypeStruct((B, H), jnp.float32),
        ),
        grid_spec=grid_spec,
        compiler_params=pltpu.CompilerParams(
            # Batch tiles are independent (v7x dual-core); time is a recurrence.
            dimension_semantics=("parallel", "arbitrary"),
        ),
    )(gx, w_hh.astype(compute_dtype))
    return y, c_f


def encoder_forward(src, params, *, compute_dtype=jnp.bfloat16):
    """src: (batch, seq) int32 token ids. Returns (hidden, cell),
    each (rnn_units, batch, hidden_size) -- matches the PyTorch Encoder."""
    emb_table = params["embedding"]                 # (vocab, emb_dim)
    src_t = jnp.transpose(src, (1, 0))              # (seq, batch)
    x = jnp.take(emb_table, src_t, axis=0)          # (seq, batch, emb_dim)
    # TODO(synk): dropout omitted (inference mode).

    hs, cs = [], []
    for layer in params["lstm"]:
        y, c_f = lstm_layer(x, layer["w_ih"], layer["w_hh"], layer["b"],
                            compute_dtype=compute_dtype)
        hs.append(y[-1])                            # final hidden = last timestep
        cs.append(c_f)
        x = y                                       # next layer input
    hidden = jnp.stack(hs, axis=0)                  # (rnn_units, batch, hidden)
    cell = jnp.stack(cs, axis=0)
    return hidden, cell


def init_params(key, input_dim, emb_dim, hidden_size, rnn_units):
    """Deterministic synthetic params (PyTorch-LSTM-shaped, pre-transposed)."""
    keys = jax.random.split(key, 1 + 4 * rnn_units)
    scale = 1.0 / np.sqrt(hidden_size)
    params = {
        "embedding": jax.random.normal(keys[0], (input_dim, emb_dim), jnp.float32) * 0.1,
        "lstm": [],
    }
    k = 1
    for layer in range(rnn_units):
        in_dim = emb_dim if layer == 0 else hidden_size
        w_ih = jax.random.uniform(keys[k], (in_dim, 4 * hidden_size),
                                  jnp.float32, -scale, scale); k += 1
        w_hh = jax.random.uniform(keys[k], (hidden_size, 4 * hidden_size),
                                  jnp.float32, -scale, scale); k += 1
        b_ih = jax.random.uniform(keys[k], (1, 4 * hidden_size),
                                  jnp.float32, -scale, scale); k += 1
        b_hh = jax.random.uniform(keys[k], (1, 4 * hidden_size),
                                  jnp.float32, -scale, scale); k += 1
        params["lstm"].append({"w_ih": w_ih, "w_hh": w_hh, "b": b_ih + b_hh})
    return params


def _reference_forward(src, params, compute_dtype=jnp.bfloat16):
    """Pure-JAX (lax.scan) reference mirroring the kernel's bf16 matmul numerics."""
    def bf(x):
        return x.astype(compute_dtype).astype(jnp.float32)

    x = jnp.take(params["embedding"], jnp.transpose(src, (1, 0)), axis=0)
    hs, cs = [], []
    for layer in params["lstm"]:
        H = layer["w_hh"].shape[0]
        B = x.shape[1]
        w_ih = bf(layer["w_ih"])
        w_hh = bf(layer["w_hh"])
        gx = jnp.einsum("sbi,ij->sbj", bf(x), w_ih) + layer["b"]   # (S, B, 4H)

        def step(carry, g_t, w_hh=w_hh, H=H):
            h, c = carry
            gates = g_t + bf(h) @ w_hh
            i = jax.nn.sigmoid(gates[:, 0 * H:1 * H])
            f = jax.nn.sigmoid(gates[:, 1 * H:2 * H])
            g = jnp.tanh(gates[:, 2 * H:3 * H])
            o = jax.nn.sigmoid(gates[:, 3 * H:4 * H])
            c = f * c + i * g
            h = o * jnp.tanh(c)
            return (h, c), h

        init = (jnp.zeros((B, H), jnp.float32), jnp.zeros((B, H), jnp.float32))
        (h_f, c_f), y = jax.lax.scan(step, init, gx)
        x = y
        hs.append(h_f)
        cs.append(c_f)
    return jnp.stack(hs, 0), jnp.stack(cs, 0)


if __name__ == "__main__":
    # Small shapes consistent with the module (hidden=128 keeps gate slices
    # lane-dense on TPU).
    input_dim = 50      # vocab size
    emb_dim = 32
    hidden_size = 128
    rnn_units = 2
    batch = 2
    seq_len = 8

    key = jax.random.PRNGKey(0)
    k_param, k_src = jax.random.split(key)
    params = init_params(k_param, input_dim, emb_dim, hidden_size, rnn_units)
    src = jax.random.randint(k_src, (batch, seq_len), 0, input_dim, dtype=jnp.int32)

    hidden, cell = encoder_forward(src, params)
    jax.block_until_ready((hidden, cell))

    # sanity: shapes + match against pure-JAX reference (bf16-matmul mirrored)
    assert hidden.shape == (rnn_units, batch, hidden_size)
    assert cell.shape == (rnn_units, batch, hidden_size)
    h_ref, c_ref = _reference_forward(src, params)
    np.testing.assert_allclose(np.asarray(hidden), np.asarray(h_ref), atol=1e-2, rtol=1e-2)
    np.testing.assert_allclose(np.asarray(cell), np.asarray(c_ref), atol=1e-2, rtol=1e-2)

    print("KERNEL_OK")
</pallas_src>

<mosaic_0001>
module attributes {stable_mosaic.version = 11 : i64} {
  func.func @_lstm_recurrence_kernel(%arg0: i32, %arg1: i32, %arg2: memref<8x2x512xf32, #tpu.memory_space<vmem>>, %arg3: memref<128x512xbf16, #tpu.memory_space<vmem>>, %arg4: memref<8x2x128xf32, #tpu.memory_space<vmem>>, %arg5: memref<2x128xf32, #tpu.memory_space<vmem>>, %arg6: memref<2x128xf32, #tpu.memory_space<vmem>>, %arg7: memref<2x128xf32, #tpu.memory_space<vmem>>) attributes {dimension_semantics = [#tpu.dimension_semantics<parallel>, #tpu.dimension_semantics<arbitrary>], iteration_bounds = array<i64: 1, 1>, scalar_prefetch = 0 : i64, scratch_operands = 2 : i64, tpu.core_type = #tpu.core_type<tc>, window_params = [{transform_indices = @transform_0, window_bounds = array<i64: 8, 2, 512>}, {pipeline_mode = #tpu.pipeline_mode<synchronous>, transform_indices = @transform_1, window_bounds = array<i64: 128, 512>}, {transform_indices = @transform_2, window_bounds = array<i64: 8, 2, 128>}, {transform_indices = @transform_3, window_bounds = array<i64: 2, 128>}]} {
    %c0_i32 = arith.constant 0 : i32
    %0 = arith.cmpi eq, %arg1, %c0_i32 : i32
    %1 = arith.extui %0 : i1 to i32
    %c0_i32_0 = arith.constant 0 : i32
    %2 = arith.cmpi ne, %1, %c0_i32_0 : i32
    scf.if %2 {
      %cst_90 = arith.constant 0.000000e+00 : f32
      %298 = vector.broadcast %cst_90 : f32 to vector<2x128xf32>
      %c0_91 = arith.constant 0 : index
      %c0_92 = arith.constant 0 : index
      %299 = vector.load %arg6[%c0_91, %c0_92] : memref<2x128xf32, #tpu.memory_space<vmem>>, vector<2x128xf32>
      tpu.vector_store %arg6[%c0_91, %c0_92], %298 {strides = array<i32>} : memref<2x128xf32, #tpu.memory_space<vmem>>, vector<2x128xf32>,
      %cst_93 = arith.constant 0.000000e+00 : f32
      %300 = vector.broadcast %cst_93 : f32 to vector<2x128xf32>
      %c0_94 = arith.constant 0 : index
      %c0_95 = arith.constant 0 : index
      %301 = vector.load %arg7[%c0_94, %c0_95] : memref<2x128xf32, #tpu.memory_space<vmem>>, vector<2x128xf32>
      tpu.vector_store %arg7[%c0_94, %c0_95], %300 {strides = array<i32>} : memref<2x128xf32, #tpu.memory_space<vmem>>, vector<2x128xf32>,
    } else {
    }
    %c0 = arith.constant 0 : index
    %c0_1 = arith.constant 0 : index
    %3 = vector.load %arg6[%c0, %c0_1] : memref<2x128xf32, #tpu.memory_space<vmem>>, vector<2x128xf32>
    %c0_2 = arith.constant 0 : index
    %c0_3 = arith.constant 0 : index
    %4 = vector.load %arg7[%c0_2, %c0_3] : memref<2x128xf32, #tpu.memory_space<vmem>>, vector<2x128xf32>
    %c0_i32_4 = arith.constant 0 : i32
    %5 = arith.index_cast %c0_i32_4 : i32 to index
    %c0_5 = arith.constant 0 : index
    %c0_6 = arith.constant 0 : index
    %6 = vector.load %arg2[%5, %c0_5, %c0_6] : memref<8x2x512xf32, #tpu.memory_space<vmem>>, vector<1x2x512xf32>
    %7 = vector.shape_cast %6 : vector<1x2x512xf32> to vector<2x512xf32>
    %8 = arith.truncf %3 : vector<2x128xf32> to vector<2x128xbf16>
    %c0_7 = arith.constant 0 : index
    %c0_8 = arith.constant 0 : index
    %9 = vector.load %arg3[%c0_7, %c0_8] : memref<128x512xbf16, #tpu.memory_space<vmem>>, vector<128x512xbf16>
    %cst = arith.constant dense<0.000000e+00> : vector<2x512xf32>
    %10 = tpu.matmul %8, %9, %cst {dimension_numbers = #tpu.dot_dimension_numbers<[1], [0], [0], [1], [0, 0, 1, 1], [], []>} : vector<2x128xbf16>, vector<128x512xbf16>, vector<2x512xf32> -> vector<2x512xf32>
    %11 = arith.addf %7, %10 : vector<2x512xf32>
    %12 = vector.extract_strided_slice %11 {offsets = [0, 0], sizes = [2, 128], strides = [1, 1]} : vector<2x512xf32> to vector<2x128xf32>
    %13 = arith.negf %12 : vector<2x128xf32>
    %14 = math.exp %13 : vector<2x128xf32>
    %cst_9 = arith.constant 1.000000e+00 : f32
    %15 = vector.broadcast %cst_9 : f32 to vector<2x128xf32>
    %16 = arith.addf %15, %14 : vector<2x128xf32>
    %17 = arith.divf %15, %16 : vector<2x128xf32>
    %18 = vector.extract_strided_slice %11 {offsets = [0, 128], sizes = [2, 128], strides = [1, 1]} : vector<2x512xf32> to vector<2x128xf32>
    %19 = arith.negf %18 : vector<2x128xf32>
    %20 = math.exp %19 : vector<2x128xf32>
    %cst_10 = arith.constant 1.000000e+00 : f32
    %21 = vector.broadcast %cst_10 : f32 to vector<2x128xf32>
    %22 = arith.addf %21, %20 : vector<2x128xf32>
    %23 = arith.divf %21, %22 : vector<2x128xf32>
    %24 = vector.extract_strided_slice %11 {offsets = [0, 256], sizes = [2, 128], strides = [1, 1]} : vector<2x512xf32> to vector<2x128xf32>
    %25 = math.tanh %24 : vector<2x128xf32>
    %26 = vector.extract_strided_slice %11 {offsets = [0, 384], sizes = [2, 128], strides = [1, 1]} : vector<2x512xf32> to vector<2x128xf32>
    %27 = arith.negf %26 : vector<2x128xf32>
    %28 = math.exp %27 : vector<2x128xf32>
    %cst_11 = arith.constant 1.000000e+00 : f32
    %29 = vector.broadcast %cst_11 : f32 to vector<2x128xf32>
    %30 = arith.addf %29, %28 : vector<2x128xf32>
    %31 = arith.divf %29, %30 : vector<2x128xf32>
    %32 = arith.mulf %23, %4 : vector<2x128xf32>
    %33 = arith.mulf %17, %25 : vector<2x128xf32>
    %34 = arith.addf %32, %33 : vector<2x128xf32>
    %35 = math.tanh %34 : vector<2x128xf32>
    %36 = arith.mulf %31, %35 : vector<2x128xf32>
    %37 = arith.index_cast %c0_i32_4 : i32 to index
    %c0_12 = arith.constant 0 : index
    %c0_13 = arith.constant 0 : index
    %38 = vector.load %arg4[%37, %c0_12, %c0_13] : memref<8x2x128xf32, #tpu.memory_space<vmem>>, vector<1x2x128xf32>
    %39 = vector.shape_cast %38 : vector<1x2x128xf32> to vector<2x128xf32>
    %40 = vector.shape_cast %36 : vector<2x128xf32> to vector<1x2x128xf32>
    tpu.vector_store %arg4[%37, %c0_12, %c0_13], %40 {strides = array<i32>} : memref<8x2x128xf32, #tpu.memory_space<vmem>>, vector<1x2x128xf32>,
    %c1_i32 = arith.constant 1 : i32
    %41 = arith.index_cast %c1_i32 : i32 to index
    %c0_14 = arith.constant 0 : index
    %c0_15 = arith.constant 0 : index
    %42 = vector.load %arg2[%41, %c0_14, %c0_15] : memref<8x2x512xf32, #tpu.memory_space<vmem>>, vector<1x2x512xf32>
    %43 = vector.shape_cast %42 : vector<1x2x512xf32> to vector<2x512xf32>
    %44 = arith.truncf %36 : vector<2x128xf32> to vector<2x128xbf16>
    %c0_16 = arith.constant 0 : index
    %c0_17 = arith.constant 0 : index
    %45 = vector.load %arg3[%c0_16, %c0_17] : memref<128x512xbf16, #tpu.memory_space<vmem>>, vector<128x512xbf16>
    %cst_18 = arith.constant dense<0.000000e+00> : vector<2x512xf32>
    %46 = tpu.matmul %44, %45, %cst_18 {dimension_numbers = #tpu.dot_dimension_numbers<[1], [0], [0], [1], [0, 0, 1, 1], [], []>} : vector<2x128xbf16>, vector<128x512xbf16>, vector<2x512xf32> -> vector<2x512xf32>
    %47 = arith.addf %43, %46 : vector<2x512xf32>
    %48 = vector.extract_strided_slice %47 {offsets = [0, 0], sizes = [2, 128], strides = [1, 1]} : vector<2x512xf32> to vector<2x128xf32>
    %49 = arith.negf %48 : vector<2x128xf32>
    %50 = math.exp %49 : vector<2x128xf32>
    %cst_19 = arith.constant 1.000000e+00 : f32
    %51 = vector.broadcast %cst_19 : f32 to vector<2x128xf32>
    %52 = arith.addf %51, %50 : vector<2x128xf32>
    %53 = arith.divf %51, %52 : vector<2x128xf32>
    %54 = vector.extract_strided_slice %47 {offsets = [0, 128], sizes = [2, 128], strides = [1, 1]} : vector<2x512xf32> to vector<2x128xf32>
    %55 = arith.negf %54 : vector<2x128xf32>
    %56 = math.exp %55 : vector<2x128xf32>
    %cst_20 = arith.constant 1.000000e+00 : f32
    %57 = vector.broadcast %cst_20 : f32 to vector<2x128xf32>
    %58 = arith.addf %57, %56 : vector<2x128xf32>
    %59 = arith.divf %57, %58 : vector<2x128xf32>
    %60 = vector.extract_strided_slice %47 {offsets = [0, 256], sizes = [2, 128], strides = [1, 1]} : vector<2x512xf32> to vector<2x128xf32>
    %61 = math.tanh %60 : vector<2x128xf32>
    %62 = vector.extract_strided_slice %47 {offsets = [0, 384], sizes = [2, 128], strides = [1, 1]} : vector<2x512xf32> to vector<2x128xf32>
    %63 = arith.negf %62 : vector<2x128xf32>
    %64 = math.exp %63 : vector<2x128xf32>
    %cst_21 = arith.constant 1.000000e+00 : f32
    %65 = vector.broadcast %cst_21 : f32 to vector<2x128xf32>
    %66 = arith.addf %65, %64 : vector<2x128xf32>
    %67 = arith.divf %65, %66 : vector<2x128xf32>
    %68 = arith.mulf %59, %34 : vector<2x128xf32>
    %69 = arith.mulf %53, %61 : vector<2x128xf32>
    %70 = arith.addf %68, %69 : vector<2x128xf32>
    %71 = math.tanh %70 : vector<2x128xf32>
    %72 = arith.mulf %67, %71 : vector<2x128xf32>
    %73 = arith.index_cast %c1_i32 : i32 to index
    %c0_22 = arith.constant 0 : index
    %c0_23 = arith.constant 0 : index
    %74 = vector.load %arg4[%73, %c0_22, %c0_23] : memref<8x2x128xf32, #tpu.memory_space<vmem>>, vector<1x2x128xf32>
    %75 = vector.shape_cast %74 : vector<1x2x128xf32> to vector<2x128xf32>
    %76 = vector.shape_cast %72 : vector<2x128xf32> to vector<1x2x128xf32>
    tpu.vector_store %arg4[%73, %c0_22, %c0_23], %76 {strides = array<i32>} : memref<8x2x128xf32, #tpu.memory_space<vmem>>, vector<1x2x128xf32>,
    %c2_i32 = arith.constant 2 : i32
    %77 = arith.index_cast %c2_i32 : i32 to index
    %c0_24 = arith.constant 0 : index
    %c0_25 = arith.constant 0 : index
    %78 = vector.load %arg2[%77, %c0_24, %c0_25] : memref<8x2x512xf32, #tpu.memory_space<vmem>>, vector<1x2x512xf32>
    %79 = vector.shape_cast %78 : vector<1x2x512xf32> to vector<2x512xf32>
    %80 = arith.truncf %72 : vector<2x128xf32> to vector<2x128xbf16>
    %c0_26 = arith.constant 0 : index
    %c0_27 = arith.constant 0 : index
    %81 = vector.load %arg3[%c0_26, %c0_27] : memref<128x512xbf16, #tpu.memory_space<vmem>>, vector<128x512xbf16>
    %cst_28 = arith.constant dense<0.000000e+00> : vector<2x512xf32>
    %82 = tpu.matmul %80, %81, %cst_28 {dimension_numbers = #tpu.dot_dimension_numbers<[1], [0], [0], [1], [0, 0, 1, 1], [], []>} : vector<2x128xbf16>, vector<128x512xbf16>, vector<2x512xf32> -> vector<2x512xf32>
    %83 = arith.addf %79, %82 : vector<2x512xf32>
    %84 = vector.extract_strided_slice %83 {offsets = [0, 0], sizes = [2, 128], strides = [1, 1]} : vector<2x512xf32> to vector<2x128xf32>
    %85 = arith.negf %84 : vector<2x128xf32>
    %86 = math.exp %85 : vector<2x128xf32>
    %cst_29 = arith.constant 1.000000e+00 : f32
    %87 = vector.broadcast %cst_29 : f32 to vector<2x128xf32>
    %88 = arith.addf %87, %86 : vector<2x128xf32>
    %89 = arith.divf %87, %88 : vector<2x128xf32>
    %90 = vector.extract_strided_slice %83 {offsets = [0, 128], sizes = [2, 128], strides = [1, 1]} : vector<2x512xf32> to vector<2x128xf32>
    %91 = arith.negf %90 : vector<2x128xf32>
    %92 = math.exp %91 : vector<2x128xf32>
    %cst_30 = arith.constant 1.000000e+00 : f32
    %93 = vector.broadcast %cst_30 : f32 to vector<2x128xf32>
    %94 = arith.addf %93, %92 : vector<2x128xf32>
    %95 = arith.divf %93, %94 : vector<2x128xf32>
    %96 = vector.extract_strided_slice %83 {offsets = [0, 256], sizes = [2, 128], strides = [1, 1]} : vector<2x512xf32> to vector<2x128xf32>
    %97 = math.tanh %96 : vector<2x128xf32>
    %98 = vector.extract_strided_slice %83 {offsets = [0, 384], sizes = [2, 128], strides = [1, 1]} : vector<2x512xf32> to vector<2x128xf32>
    %99 = arith.negf %98 : vector<2x128xf32>
    %100 = math.exp %99 : vector<2x128xf32>
    %cst_31 = arith.constant 1.000000e+00 : f32
    %101 = vector.broadcast %cst_31 : f32 to vector<2x128xf32>
    %102 = arith.addf %101, %100 : vector<2x128xf32>
    %103 = arith.divf %101, %102 : vector<2x128xf32>
    %104 = arith.mulf %95, %70 : vector<2x128xf32>
    %105 = arith.mulf %89, %97 : vector<2x128xf32>
    %106 = arith.addf %104, %105 : vector<2x128xf32>
    %107 = math.tanh %106 : vector<2x128xf32>
    %108 = arith.mulf %103, %107 : vector<2x128xf32>
    %109 = arith.index_cast %c2_i32 : i32 to index
    %c0_32 = arith.constant 0 : index
    %c0_33 = arith.constant 0 : index
    %110 = vector.load %arg4[%109, %c0_32, %c0_33] : memref<8x2x128xf32, #tpu.memory_space<vmem>>, vector<1x2x128xf32>
    %111 = vector.shape_cast %110 : vector<1x2x128xf32> to vector<2x128xf32>
    %112 = vector.shape_cast %108 : vector<2x128xf32> to vector<1x2x128xf32>
    tpu.vector_store %arg4[%109, %c0_32, %c0_33], %112 {strides = array<i32>} : memref<8x2x128xf32, #tpu.memory_space<vmem>>, vector<1x2x128xf32>,
    %c3_i32 = arith.constant 3 : i32
    %113 = arith.index_cast %c3_i32 : i32 to index
    %c0_34 = arith.constant 0 : index
    %c0_35 = arith.constant 0 : index
    %114 = vector.load %arg2[%113, %c0_34, %c0_35] : memref<8x2x512xf32, #tpu.memory_space<vmem>>, vector<1x2x512xf32>
    %115 = vector.shape_cast %114 : vector<1x2x512xf32> to vector<2x512xf32>
    %116 = arith.truncf %108 : vector<2x128xf32> to vector<2x128xbf16>
    %c0_36 = arith.constant 0 : index
    %c0_37 = arith.constant 0 : index
    %117 = vector.load %arg3[%c0_36, %c0_37] : memref<128x512xbf16, #tpu.memory_space<vmem>>, vector<128x512xbf16>
    %cst_38 = arith.constant dense<0.000000e+00> : vector<2x512xf32>
    %118 = tpu.matmul %116, %117, %cst_38 {dimension_numbers = #tpu.dot_dimension_numbers<[1], [0], [0], [1], [0, 0, 1, 1], [], []>} : vector<2x128xbf16>, vector<128x512xbf16>, vector<2x512xf32> -> vector<2x512xf32>
    %119 = arith.addf %115, %118 : vector<2x512xf32>
    %120 = vector.extract_strided_slice %119 {offsets = [0, 0], sizes = [2, 128], strides = [1, 1]} : vector<2x512xf32> to vector<2x128xf32>
    %121 = arith.negf %120 : vector<2x128xf32>
    %122 = math.exp %121 : vector<2x128xf32>
    %cst_39 = arith.constant 1.000000e+00 : f32
    %123 = vector.broadcast %cst_39 : f32 to vector<2x128xf32>
    %124 = arith.addf %123, %122 : vector<2x128xf32>
    %125 = arith.divf %123, %124 : vector<2x128xf32>
    %126 = vector.extract_strided_slice %119 {offsets = [0, 128], sizes = [2, 128], strides = [1, 1]} : vector<2x512xf32> to vector<2x128xf32>
    %127 = arith.negf %126 : vector<2x128xf32>
    %128 = math.exp %127 : vector<2x128xf32>
    %cst_40 = arith.constant 1.000000e+00 : f32
    %129 = vector.broadcast %cst_40 : f32 to vector<2x128xf32>
    %130 = arith.addf %129, %128 : vector<2x128xf32>
    %131 = arith.divf %129, %130 : vector<2x128xf32>
    %132 = vector.extract_strided_slice %119 {offsets = [0, 256], sizes = [2, 128], strides = [1, 1]} : vector<2x512xf32> to vector<2x128xf32>
    %133 = math.tanh %132 : vector<2x128xf32>
    %134 = vector.extract_strided_slice %119 {offsets = [0, 384], sizes = [2, 128], strides = [1, 1]} : vector<2x512xf32> to vector<2x128xf32>
    %135 = arith.negf %134 : vector<2x128xf32>
    %136 = math.exp %135 : vector<2x128xf32>
    %cst_41 = arith.constant 1.000000e+00 : f32
    %137 = vector.broadcast %cst_41 : f32 to vector<2x128xf32>
    %138 = arith.addf %137, %136 : vector<2x128xf32>
    %139 = arith.divf %137, %138 : vector<2x128xf32>
    %140 = arith.mulf %131, %106 : vector<2x128xf32>
    %141 = arith.mulf %125, %133 : vector<2x128xf32>
    %142 = arith.addf %140, %141 : vector<2x128xf32>
    %143 = math.tanh %142 : vector<2x128xf32>
    %144 = arith.mulf %139, %143 : vector<2x128xf32>
    %145 = arith.index_cast %c3_i32 : i32 to index
    %c0_42 = arith.constant 0 : index
    %c0_43 = arith.constant 0 : index
    %146 = vector.load %arg4[%145, %c0_42, %c0_43] : memref<8x2x128xf32, #tpu.memory_space<vmem>>, vector<1x2x128xf32>
    %147 = vector.shape_cast %146 : vector<1x2x128xf32> to vector<2x128xf32>
    %148 = vector.shape_cast %144 : vector<2x128xf32> to vector<1x2x128xf32>
    tpu.vector_store %arg4[%145, %c0_42, %c0_43], %148 {strides = array<i32>} : memref<8x2x128xf32, #tpu.memory_space<vmem>>, vector<1x2x128xf32>,
    %c4_i32 = arith.constant 4 : i32
    %149 = arith.index_cast %c4_i32 : i32 to index
    %c0_44 = arith.constant 0 : index
    %c0_45 = arith.constant 0 : index
    %150 = vector.load %arg2[%149, %c0_44, %c0_45] : memref<8x2x512xf32, #tpu.memory_space<vmem>>, vector<1x2x512xf32>
    %151 = vector.shape_cast %150 : vector<1x2x512xf32> to vector<2x512xf32>
    %152 = arith.truncf %144 : vector<2x128xf32> to vector<2x128xbf16>
    %c0_46 = arith.constant 0 : index
    %c0_47 = arith.constant 0 : index
    %153 = vector.load %arg3[%c0_46, %c0_47] : memref<128x512xbf16, #tpu.memory_space<vmem>>, vector<128x512xbf16>
    %cst_48 = arith.constant dense<0.000000e+00> : vector<2x512xf32>
    %154 = tpu.matmul %152, %153, %cst_48 {dimension_numbers = #tpu.dot_dimension_numbers<[1], [0], [0], [1], [0, 0, 1, 1], [], []>} : vector<2x128xbf16>, vector<128x512xbf16>, vector<2x512xf32> -> vector<2x512xf32>
    %155 = arith.addf %151, %154 : vector<2x512xf32>
    %156 = vector.extract_strided_slice %155 {offsets = [0, 0], sizes = [2, 128], strides = [1, 1]} : vector<2x512xf32> to vector<2x128xf32>
    %157 = arith.negf %156 : vector<2x128xf32>
    %158 = math.exp %157 : vector<2x128xf32>
    %cst_49 = arith.constant 1.000000e+00 : f32
    %159 = vector.broadcast %cst_49 : f32 to vector<2x128xf32>
    %160 = arith.addf %159, %158 : vector<2x128xf32>
    %161 = arith.divf %159, %160 : vector<2x128xf32>
    %162 = vector.extract_strided_slice %155 {offsets = [0, 128], sizes = [2, 128], strides = [1, 1]} : vector<2x512xf32> to vector<2x128xf32>
    %163 = arith.negf %162 : vector<2x128xf32>
    %164 = math.exp %163 : vector<2x128xf32>
    %cst_50 = arith.constant 1.000000e+00 : f32
    %165 = vector.broadcast %cst_50 : f32 to vector<2x128xf32>
    %166 = arith.addf %165, %164 : vector<2x128xf32>
    %167 = arith.divf %165, %166 : vector<2x128xf32>
    %168 = vector.extract_strided_slice %155 {offsets = [0, 256], sizes = [2, 128], strides = [1, 1]} : vector<2x512xf32> to vector<2x128xf32>
    %169 = math.tanh %168 : vector<2x128xf32>
    %170 = vector.extract_strided_slice %155 {offsets = [0, 384], sizes = [2, 128], strides = [1, 1]} : vector<2x512xf32> to vector<2x128xf32>
    %171 = arith.negf %170 : vector<2x128xf32>
    %172 = math.exp %171 : vector<2x128xf32>
    %cst_51 = arith.constant 1.000000e+00 : f32
    %173 = vector.broadcast %cst_51 : f32 to vector<2x128xf32>
    %174 = arith.addf %173, %172 : vector<2x128xf32>
    %175 = arith.divf %173, %174 : vector<2x128xf32>
    %176 = arith.mulf %167, %142 : vector<2x128xf32>
    %177 = arith.mulf %161, %169 : vector<2x128xf32>
    %178 = arith.addf %176, %177 : vector<2x128xf32>
    %179 = math.tanh %178 : vector<2x128xf32>
    %180 = arith.mulf %175, %179 : vector<2x128xf32>
    %181 = arith.index_cast %c4_i32 : i32 to index
    %c0_52 = arith.constant 0 : index
    %c0_53 = arith.constant 0 : index
    %182 = vector.load %arg4[%181, %c0_52, %c0_53] : memref<8x2x128xf32, #tpu.memory_space<vmem>>, vector<1x2x128xf32>
    %183 = vector.shape_cast %182 : vector<1x2x128xf32> to vector<2x128xf32>
    %184 = vector.shape_cast %180 : vector<2x128xf32> to vector<1x2x128xf32>
    tpu.vector_store %arg4[%181, %c0_52, %c0_53], %184 {strides = array<i32>} : memref<8x2x128xf32, #tpu.memory_space<vmem>>, vector<1x2x128xf32>,
    %c5_i32 = arith.constant 5 : i32
    %185 = arith.index_cast %c5_i32 : i32 to index
    %c0_54 = arith.constant 0 : index
    %c0_55 = arith.constant 0 : index
    %186 = vector.load %arg2[%185, %c0_54, %c0_55] : memref<8x2x512xf32, #tpu.memory_space<vmem>>, vector<1x2x512xf32>
    %187 = vector.shape_cast %186 : vector<1x2x512xf32> to vector<2x512xf32>
    %188 = arith.truncf %180 : vector<2x128xf32> to vector<2x128xbf16>
    %c0_56 = arith.constant 0 : index
    %c0_57 = arith.constant 0 : index
    %189 = vector.load %arg3[%c0_56, %c0_57] : memref<128x512xbf16, #tpu.memory_space<vmem>>, vector<128x512xbf16>
    %cst_58 = arith.constant dense<0.000000e+00> : vector<2x512xf32>
    %190 = tpu.matmul %188, %189, %cst_58 {dimension_numbers = #tpu.dot_dimension_numbers<[1], [0], [0], [1], [0, 0, 1, 1], [], []>} : vector<2x128xbf16>, vector<128x512xbf16>, vector<2x512xf32> -> vector<2x512xf32>
    %191 = arith.addf %187, %190 : vector<2x512xf32>
    %192 = vector.extract_strided_slice %191 {offsets = [0, 0], sizes = [2, 128], strides = [1, 1]} : vector<2x512xf32> to vector<2x128xf32>
    %193 = arith.negf %192 : vector<2x128xf32>
    %194 = math.exp %193 : vector<2x128xf32>
    %cst_59 = arith.constant 1.000000e+00 : f32
    %195 = vector.broadcast %cst_59 : f32 to vector<2x128xf32>
    %196 = arith.addf %195, %194 : vector<2x128xf32>
    %197 = arith.divf %195, %196 : vector<2x128xf32>
    %198 = vector.extract_strided_slice %191 {offsets = [0, 128], sizes = [2, 128], strides = [1, 1]} : vector<2x512xf32> to vector<2x128xf32>
    %199 = arith.negf %198 : vector<2x128xf32>
    %200 = math.exp %199 : vector<2x128xf32>
    %cst_60 = arith.constant 1.000000e+00 : f32
    %201 = vector.broadcast %cst_60 : f32 to vector<2x128xf32>
    %202 = arith.addf %201, %200 : vector<2x128xf32>
    %203 = arith.divf %201, %202 : vector<2x128xf32>
    %204 = vector.extract_strided_slice %191 {offsets = [0, 256], sizes = [2, 128], strides = [1, 1]} : vector<2x512xf32> to vector<2x128xf32>
    %205 = math.tanh %204 : vector<2x128xf32>
    %206 = vector.extract_strided_slice %191 {offsets = [0, 384], sizes = [2, 128], strides = [1, 1]} : vector<2x512xf32> to vector<2x128xf32>
    %207 = arith.negf %206 : vector<2x128xf32>
    %208 = math.exp %207 : vector<2x128xf32>
    %cst_61 = arith.constant 1.000000e+00 : f32
    %209 = vector.broadcast %cst_61 : f32 to vector<2x128xf32>
    %210 = arith.addf %209, %208 : vector<2x128xf32>
    %211 = arith.divf %209, %210 : vector<2x128xf32>
    %212 = arith.mulf %203, %178 : vector<2x128xf32>
    %213 = arith.mulf %197, %205 : vector<2x128xf32>
    %214 = arith.addf %212, %213 : vector<2x128xf32>
    %215 = math.tanh %214 : vector<2x128xf32>
    %216 = arith.mulf %211, %215 : vector<2x128xf32>
    %217 = arith.index_cast %c5_i32 : i32 to index
    %c0_62 = arith.constant 0 : index
    %c0_63 = arith.constant 0 : index
    %218 = vector.load %arg4[%217, %c0_62, %c0_63] : memref<8x2x128xf32, #tpu.memory_space<vmem>>, vector<1x2x128xf32>
    %219 = vector.shape_cast %218 : vector<1x2x128xf32> to vector<2x128xf32>
    %220 = vector.shape_cast %216 : vector<2x128xf32> to vector<1x2x128xf32>
    tpu.vector_store %arg4[%217, %c0_62, %c0_63], %220 {strides = array<i32>} : memref<8x2x128xf32, #tpu.memory_space<vmem>>, vector<1x2x128xf32>,
    %c6_i32 = arith.constant 6 : i32
    %221 = arith.index_cast %c6_i32 : i32 to index
    %c0_64 = arith.constant 0 : index
    %c0_65 = arith.constant 0 : index
    %222 = vector.load %arg2[%221, %c0_64, %c0_65] : memref<8x2x512xf32, #tpu.memory_space<vmem>>, vector<1x2x512xf32>
    %223 = vector.shape_cast %222 : vector<1x2x512xf32> to vector<2x512xf32>
    %224 = arith.truncf %216 : vector<2x128xf32> to vector<2x128xbf16>
    %c0_66 = arith.constant 0 : index
    %c0_67 = arith.constant 0 : index
    %225 = vector.load %arg3[%c0_66, %c0_67] : memref<128x512xbf16, #tpu.memory_space<vmem>>, vector<128x512xbf16>
    %cst_68 = arith.constant dense<0.000000e+00> : vector<2x512xf32>
    %226 = tpu.matmul %224, %225, %cst_68 {dimension_numbers = #tpu.dot_dimension_numbers<[1], [0], [0], [1], [0, 0, 1, 1], [], []>} : vector<2x128xbf16>, vector<128x512xbf16>, vector<2x512xf32> -> vector<2x512xf32>
    %227 = arith.addf %223, %226 : vector<2x512xf32>
    %228 = vector.extract_strided_slice %227 {offsets = [0, 0], sizes = [2, 128], strides = [1, 1]} : vector<2x512xf32> to vector<2x128xf32>
    %229 = arith.negf %228 : vector<2x128xf32>
    %230 = math.exp %229 : vector<2x128xf32>
    %cst_69 = arith.constant 1.000000e+00 : f32
    %231 = vector.broadcast %cst_69 : f32 to vector<2x128xf32>
    %232 = arith.addf %231, %230 : vector<2x128xf32>
    %233 = arith.divf %231, %232 : vector<2x128xf32>
    %234 = vector.extract_strided_slice %227 {offsets = [0, 128], sizes = [2, 128], strides = [1, 1]} : vector<2x512xf32> to vector<2x128xf32>
    %235 = arith.negf %234 : vector<2x128xf32>
    %236 = math.exp %235 : vector<2x128xf32>
    %cst_70 = arith.constant 1.000000e+00 : f32
    %237 = vector.broadcast %cst_70 : f32 to vector<2x128xf32>
    %238 = arith.addf %237, %236 : vector<2x128xf32>
    %239 = arith.divf %237, %238 : vector<2x128xf32>
    %240 = vector.extract_strided_slice %227 {offsets = [0, 256], sizes = [2, 128], strides = [1, 1]} : vector<2x512xf32> to vector<2x128xf32>
    %241 = math.tanh %240 : vector<2x128xf32>
    %242 = vector.extract_strided_slice %227 {offsets = [0, 384], sizes = [2, 128], strides = [1, 1]} : vector<2x512xf32> to vector<2x128xf32>
    %243 = arith.negf %242 : vector<2x128xf32>
    %244 = math.exp %243 : vector<2x128xf32>
    %cst_71 = arith.constant 1.000000e+00 : f32
    %245 = vector.broadcast %cst_71 : f32 to vector<2x128xf32>
    %246 = arith.addf %245, %244 : vector<2x128xf32>
    %247 = arith.divf %245, %246 : vector<2x128xf32>
    %248 = arith.mulf %239, %214 : vector<2x128xf32>
    %249 = arith.mulf %233, %241 : vector<2x128xf32>
    %250 = arith.addf %248, %249 : vector<2x128xf32>
    %251 = math.tanh %250 : vector<2x128xf32>
    %252 = arith.mulf %247, %251 : vector<2x128xf32>
    %253 = arith.index_cast %c6_i32 : i32 to index
    %c0_72 = arith.constant 0 : index
    %c0_73 = arith.constant 0 : index
    %254 = vector.load %arg4[%253, %c0_72, %c0_73] : memref<8x2x128xf32, #tpu.memory_space<vmem>>, vector<1x2x128xf32>
    %255 = vector.shape_cast %254 : vector<1x2x128xf32> to vector<2x128xf32>
    %256 = vector.shape_cast %252 : vector<2x128xf32> to vector<1x2x128xf32>
    tpu.vector_store %arg4[%253, %c0_72, %c0_73], %256 {strides = array<i32>} : memref<8x2x128xf32, #tpu.memory_space<vmem>>, vector<1x2x128xf32>,
    %c7_i32 = arith.constant 7 : i32
    %257 = arith.index_cast %c7_i32 : i32 to index
    %c0_74 = arith.constant 0 : index
    %c0_75 = arith.constant 0 : index
    %258 = vector.load %arg2[%257, %c0_74, %c0_75] : memref<8x2x512xf32, #tpu.memory_space<vmem>>, vector<1x2x512xf32>
    %259 = vector.shape_cast %258 : vector<1x2x512xf32> to vector<2x512xf32>
    %260 = arith.truncf %252 : vector<2x128xf32> to vector<2x128xbf16>
    %c0_76 = arith.constant 0 : index
    %c0_77 = arith.constant 0 : index
    %261 = vector.load %arg3[%c0_76, %c0_77] : memref<128x512xbf16, #tpu.memory_space<vmem>>, vector<128x512xbf16>
    %cst_78 = arith.constant dense<0.000000e+00> : vector<2x512xf32>
    %262 = tpu.matmul %260, %261, %cst_78 {dimension_numbers = #tpu.dot_dimension_numbers<[1], [0], [0], [1], [0, 0, 1, 1], [], []>} : vector<2x128xbf16>, vector<128x512xbf16>, vector<2x512xf32> -> vector<2x512xf32>
    %263 = arith.addf %259, %262 : vector<2x512xf32>
    %264 = vector.extract_strided_slice %263 {offsets = [0, 0], sizes = [2, 128], strides = [1, 1]} : vector<2x512xf32> to vector<2x128xf32>
    %265 = arith.negf %264 : vector<2x128xf32>
    %266 = math.exp %265 : vector<2x128xf32>
    %cst_79 = arith.constant 1.000000e+00 : f32
    %267 = vector.broadcast %cst_79 : f32 to vector<2x128xf32>
    %268 = arith.addf %267, %266 : vector<2x128xf32>
    %269 = arith.divf %267, %268 : vector<2x128xf32>
    %270 = vector.extract_strided_slice %263 {offsets = [0, 128], sizes = [2, 128], strides = [1, 1]} : vector<2x512xf32> to vector<2x128xf32>
    %271 = arith.negf %270 : vector<2x128xf32>
    %272 = math.exp %271 : vector<2x128xf32>
    %cst_80 = arith.constant 1.000000e+00 : f32
    %273 = vector.broadcast %cst_80 : f32 to vector<2x128xf32>
    %274 = arith.addf %273, %272 : vector<2x128xf32>
    %275 = arith.divf %273, %274 : vector<2x128xf32>
    %276 = vector.extract_strided_slice %263 {offsets = [0, 256], sizes = [2, 128], strides = [1, 1]} : vector<2x512xf32> to vector<2x128xf32>
    %277 = math.tanh %276 : vector<2x128xf32>
    %278 = vector.extract_strided_slice %263 {offsets = [0, 384], sizes = [2, 128], strides = [1, 1]} : vector<2x512xf32> to vector<2x128xf32>
    %279 = arith.negf %278 : vector<2x128xf32>
    %280 = math.exp %279 : vector<2x128xf32>
    %cst_81 = arith.constant 1.000000e+00 : f32
    %281 = vector.broadcast %cst_81 : f32 to vector<2x128xf32>
    %282 = arith.addf %281, %280 : vector<2x128xf32>
    %283 = arith.divf %281, %282 : vector<2x128xf32>
    %284 = arith.mulf %275, %250 : vector<2x128xf32>
    %285 = arith.mulf %269, %277 : vector<2x128xf32>
    %286 = arith.addf %284, %285 : vector<2x128xf32>
    %287 = math.tanh %286 : vector<2x128xf32>
    %288 = arith.mulf %283, %287 : vector<2x128xf32>
    %289 = arith.index_cast %c7_i32 : i32 to index
    %c0_82 = arith.constant 0 : index
    %c0_83 = arith.constant 0 : index
    %290 = vector.load %arg4[%289, %c0_82, %c0_83] : memref<8x2x128xf32, #tpu.memory_space<vmem>>, vector<1x2x128xf32>
    %291 = vector.shape_cast %290 : vector<1x2x128xf32> to vector<2x128xf32>
    %292 = vector.shape_cast %288 : vector<2x128xf32> to vector<1x2x128xf32>
    tpu.vector_store %arg4[%289, %c0_82, %c0_83], %292 {strides = array<i32>} : memref<8x2x128xf32, #tpu.memory_space<vmem>>, vector<1x2x128xf32>,
    %c8_i32 = arith.constant 8 : i32
    %c0_84 = arith.constant 0 : index
    %c0_85 = arith.constant 0 : index
    %293 = vector.load %arg6[%c0_84, %c0_85] : memref<2x128xf32, #tpu.memory_space<vmem>>, vector<2x128xf32>
    tpu.vector_store %arg6[%c0_84, %c0_85], %288 {strides = array<i32>} : memref<2x128xf32, #tpu.memory_space<vmem>>, vector<2x128xf32>,
    %c0_86 = arith.constant 0 : index
    %c0_87 = arith.constant 0 : index
    %294 = vector.load %arg7[%c0_86, %c0_87] : memref<2x128xf32, #tpu.memory_space<vmem>>, vector<2x128xf32>
    tpu.vector_store %arg7[%c0_86, %c0_87], %286 {strides = array<i32>} : memref<2x128xf32, #tpu.memory_space<vmem>>, vector<2x128xf32>,
    %c0_i32_88 = arith.constant 0 : i32
    %295 = arith.cmpi eq, %arg1, %c0_i32_88 : i32
    %296 = arith.extui %295 : i1 to i32
    %c0_i32_89 = arith.constant 0 : i32
    %297 = arith.cmpi ne, %296, %c0_i32_89 : i32
    scf.if %297 {
      %c0_90 = arith.constant 0 : index
      %c0_91 = arith.constant 0 : index
      %298 = vector.load %arg5[%c0_90, %c0_91] : memref<2x128xf32, #tpu.memory_space<vmem>>, vector<2x128xf32>
      tpu.vector_store %arg5[%c0_90, %c0_91], %286 {strides = array<i32>} : memref<2x128xf32, #tpu.memory_space<vmem>>, vector<2x128xf32>,
    } else {
    }
    return
  }
  func.func @transform_0(%arg0: i32, %arg1: i32) -> (i32, i32, i32) {
    %c0_i32 = arith.constant 0 : i32
    %c0_i32_0 = arith.constant 0 : i32
    return %arg1, %arg0, %c0_i32 : i32, i32, i32
  }
  func.func @transform_1(%arg0: i32, %arg1: i32) -> (i32, i32) {
    %c0_i32 = arith.constant 0 : i32
    %c0_i32_0 = arith.constant 0 : i32
    %c0_i32_1 = arith.constant 0 : i32
    return %c0_i32, %c0_i32_0 : i32, i32
  }
  func.func @transform_2(%arg0: i32, %arg1: i32) -> (i32, i32, i32) {
    %c0_i32 = arith.constant 0 : i32
    %c0_i32_0 = arith.constant 0 : i32
    return %arg1, %arg0, %c0_i32 : i32, i32, i32
  }
  func.func @transform_3(%arg0: i32, %arg1: i32) -> (i32, i32) {
    %c0_i32 = arith.constant 0 : i32
    %c0_i32_0 = arith.constant 0 : i32
    return %arg0, %c0_i32 : i32, i32
  }
}

</mosaic_0001>

<llo_original>
// kernel: tpu_custom_call.1
$region0: #{tpu_custom_call.1}
  #allocation0 [shape = 'u32[]', space=smem, size = 0x4, offset = 0x4, fixed_abs, tag = 'smem constant byte address 0x4 - core index']
  #allocation1 [shape = 'u32[72,128]{1,0:T(1,128)}', space=vmem, size = 0x9000, scoped, tag = 'internal scratch']
  #allocation2 [shape = 'f32[2,128]{1,0:T(2,128)}', space=vmem, size = 0x400, scoped, tag = 'scratch operand']
  #allocation3 [shape = 'f32[2,128]{1,0:T(2,128)}', space=vmem, size = 0x400, scoped, tag = 'scratch operand']
  %s0 = inlined_call_operand.hbm [shape: f32[8,2,512], index: 0, kind: input, shape index: {}]
  %s1 = inlined_call_operand.hbm [shape: bf16[128,512], index: 1, kind: input, shape index: {}]
  %s2 = inlined_call_operand.hbm [shape: f32[8,2,128], index: 2, kind: output, shape index: {0}]
  %s3 = inlined_call_operand.hbm [shape: f32[2,128], index: 3, kind: output, shape index: {1}]
  %4 = xla_tuple %s2, %s3
  %s5 = sld [smem:[#allocation0]]
  $region42: #{tpu_custom_call.1} parent=0
    _
  %s7 = ssub.s32 1, %s5
  %s8 = scalar_select 0, %s7, %s5
  $region1: #{tpu_custom_call.1} parent=0
    #allocation4 [shape = 'u8[32768]{0}', space=vmem, size = 0x8000, scoped, tag = 'input window, operand 0, single buffered']
    #allocation5 [shape = 's32[1]{0}', space=sflag, size = 0x4, scoped, tag = 'scoped memory for tpu_custom_call.1']
    #allocation6 [shape = 's32[1]{0}', space=sflag, size = 0x4, scoped, tag = 'scoped memory for tpu_custom_call.1']
    #allocation7 [shape = 'u8[131072]{0}', space=vmem, size = 0x20000, scoped, tag = 'input window, operand 1, single buffered']
    #allocation8 [shape = 's32[1]{0}', space=sflag, size = 0x4, scoped, tag = 'scoped memory for tpu_custom_call.1']
    #allocation9 [shape = 'u8[8192]{0}', space=vmem, size = 0x2000, scoped, tag = 'output window, operand 0, single buffered']
    #allocation10 [shape = 'u8[1024]{0}', space=vmem, size = 0x400, scoped, tag = 'output window, operand 1, single buffered']
    #allocation11 [shape = 's32[1]{0}', space=sflag, size = 0x4, scoped, tag = 'scoped memory for tpu_custom_call.1']
    %9 = vsyncpa [#allocation5], 0
    %10 = vsyncpa [#allocation8], 0
    %11 = vsyncpa [#allocation6], 0
    %12 = vsyncpa [#allocation11], 0
    // Predicated region
    $region2: #{tpu_custom_call.1} parent=1 // pred_check
      _
    $region3: #{tpu_custom_call.1} parent=1 // pred_check_branch
      %14 = sbr.rel (0) target = $region5
    $region4: #{tpu_custom_call.1} parent=1 // pred_region
      %16 = vsyncadd [#allocation5], 0
      %s17 = sshll.u32 %s0, 4
      %s18 = int_to_ptr.hbm [resolvable:$true] %s17
      %s19 = sshll.u32 [#allocation4], 4
      %s20 = int_to_ptr.vmem [resolvable:$true] %s19
      %25 = dma.hbm_to_vmem [thread:$0]  %s18, 1024, %s20, [#allocation5], 128, 128, 8
    $region5: #{tpu_custom_call.1} parent=1 // pred_fallthru
      _
    // Predicated region
    $region6: #{tpu_custom_call.1} parent=1 // pred_check
      _
    $region7: #{tpu_custom_call.1} parent=1 // pred_check_branch
      %27 = sbr.rel (0) target = $region9
    $region8: #{tpu_custom_call.1} parent=1 // pred_region
      %29 = vsyncadd [#allocation8], 0
      %s30 = sshll.u32 %s1, 4
      %s31 = int_to_ptr.hbm [resolvable:$true] %s30
      %s32 = sshll.u32 [#allocation7], 4
      %s33 = int_to_ptr.vmem [resolvable:$true] %s32
      %38 = dma.hbm_to_vmem [thread:$0]  %s31, 4096, %s33, [#allocation8], 256, 256, 16
    $region9: #{tpu_custom_call.1} parent=1 // pred_fallthru
      _
    // Predicated region
    $region10: #{tpu_custom_call.1} parent=1 // pred_check
      _
    $region11: #{tpu_custom_call.1} parent=1 // pred_check_branch
      %40 = sbr.rel (0) target = $region13
    $region12: #{tpu_custom_call.1} parent=1 // pred_region
      %42 = dma.done [#allocation5], 1024
    $region13: #{tpu_custom_call.1} parent=1 // pred_fallthru
      _
    // Predicated region
    $region14: #{tpu_custom_call.1} parent=1 // pred_check
      _
    $region15: #{tpu_custom_call.1} parent=1 // pred_check_branch
      %44 = sbr.rel (0) target = $region17
    $region16: #{tpu_custom_call.1} parent=1 // pred_region
      %46 = dma.done [#allocation8], 4096
    $region17: #{tpu_custom_call.1} parent=1 // pred_fallthru
      _
    %p47 = scmp.eq.s32.totalorder 0, 0
    // Predicated region
    $region18: #{tpu_custom_call.1} parent=1 // pred_check
      %p48 = pneg %p47
    $region19: #{tpu_custom_call.1} parent=1 // pred_check_branch
      %50 = sbr.rel (%p48) target = $region21
    $region20: #{tpu_custom_call.1} parent=1 // pred_region
      %51 = vst [vmem:[#allocation2] sm:$0x3] 0.0
      %52 = vst [vmem:[#allocation3] sm:$0x3] 0.0
    $region21: #{tpu_custom_call.1} parent=1 // pred_fallthru
      _
    %v53 = vld [vmem:[#allocation2] sm:$0x3]
    %v54 = vld [vmem:[#allocation3] sm:$0x3]
    %v55 = vld [vmem:[#allocation4] sm:$0xff]
    %v56 = vpack.c.bf16 %v53, %v53
    %v57 = vld [vmem:[#allocation7] sm:$0xff]
    %v58 = vld [vmem:[#allocation7 + $0x8] sm:$0xff]
    %v59 = vld [vmem:[#allocation7 + $0x10] sm:$0xff]
    %v60 = vld [vmem:[#allocation7 + $0x18] sm:$0xff]
    %v61 = vld [vmem:[#allocation7 + $0x20] sm:$0xff]
    %v62 = vld [vmem:[#allocation7 + $0x28] sm:$0xff]
    %v63 = vld [vmem:[#allocation7 + $0x30] sm:$0xff]
    %v64 = vld [vmem:[#allocation7 + $0x38] sm:$0xff]
    %v65 = vld [vmem:[#allocation7 + $0x40] sm:$0xff]
    %v66 = vld [vmem:[#allocation7 + $0x48] sm:$0xff]
    %v67 = vld [vmem:[#allocation7 + $0x50] sm:$0xff]
    %v68 = vld [vmem:[#allocation7 + $0x58] sm:$0xff]
    %v69 = vld [vmem:[#allocation7 + $0x60] sm:$0xff]
    %v70 = vld [vmem:[#allocation7 + $0x68] sm:$0xff]
    %v71 = vld [vmem:[#allocation7 + $0x70] sm:$0xff]
    %v72 = vld [vmem:[#allocation7 + $0x78] sm:$0xff]
    %v73 = vld [vmem:[#allocation7 + $0x80] sm:$0xff]
    %v74 = vld [vmem:[#allocation7 + $0x88] sm:$0xff]
    %v75 = vld [vmem:[#allocation7 + $0x90] sm:$0xff]
    %v76 = vld [vmem:[#allocation7 + $0x98] sm:$0xff]
    %v77 = vld [vmem:[#allocation7 + $0xa0] sm:$0xff]
    %v78 = vld [vmem:[#allocation7 + $0xa8] sm:$0xff]
    %v79 = vld [vmem:[#allocation7 + $0xb0] sm:$0xff]
    %v80 = vld [vmem:[#allocation7 + $0xb8] sm:$0xff]
    %v81 = vld [vmem:[#allocation7 + $0xc0] sm:$0xff]
    %v82 = vld [vmem:[#allocation7 + $0xc8] sm:$0xff]
    %v83 = vld [vmem:[#allocation7 + $0xd0] sm:$0xff]
    %v84 = vld [vmem:[#allocation7 + $0xd8] sm:$0xff]
    %v85 = vld [vmem:[#allocation7 + $0xe0] sm:$0xff]
    %v86 = vld [vmem:[#allocation7 + $0xe8] sm:$0xff]
    %v87 = vld [vmem:[#allocation7 + $0xf0] sm:$0xff]
    %v88 = vld [vmem:[#allocation7 + $0xf8] sm:$0xff]
    %v121 = vunpack.c.l.b16 %v57
    %v122 = vunpack.c.h.b16 %v57
    %v123 = vunpack.c.l.b16 %v58
    %v124 = vunpack.c.h.b16 %v58
    %v125 = vunpack.c.l.b16 %v59
    %v126 = vunpack.c.h.b16 %v59
    %v127 = vunpack.c.l.b16 %v60
    %v128 = vunpack.c.h.b16 %v60
    %v129 = vunpack.c.l.b16 %v61
    %v130 = vunpack.c.h.b16 %v61
    %v131 = vunpack.c.l.b16 %v62
    %v132 = vunpack.c.h.b16 %v62
    %v133 = vunpack.c.l.b16 %v63
    %v134 = vunpack.c.h.b16 %v63
    %v135 = vunpack.c.l.b16 %v64
    %v136 = vunpack.c.h.b16 %v64
    %v137 = vunpack.c.l.b16 %v65
    %v138 = vunpack.c.h.b16 %v65
    %v139 = vunpack.c.l.b16 %v66
    %v140 = vunpack.c.h.b16 %v66
    %v141 = vunpack.c.l.b16 %v67
    %v142 = vunpack.c.h.b16 %v67
    %v143 = vunpack.c.l.b16 %v68
    %v144 = vunpack.c.h.b16 %v68
    %v145 = vunpack.c.l.b16 %v69
    %v146 = vunpack.c.h.b16 %v69
    %v147 = vunpack.c.l.b16 %v70
    %v148 = vunpack.c.h.b16 %v70
    %v149 = vunpack.c.l.b16 %v71
    %v150 = vunpack.c.h.b16 %v71
    %v151 = vunpack.c.l.b16 %v72
    %v152 = vunpack.c.h.b16 %v72
    %v153 = vunpack.c.l.b16 %v73
    %v154 = vunpack.c.h.b16 %v73
    %v155 = vunpack.c.l.b16 %v74
    %v156 = vunpack.c.h.b16 %v74
    %v157 = vunpack.c.l.b16 %v75
    %v158 = vunpack.c.h.b16 %v75
    %v159 = vunpack.c.l.b16 %v76
    %v160 = vunpack.c.h.b16 %v76
    %v161 = vunpack.c.l.b16 %v77
    %v162 = vunpack.c.h.b16 %v77
    %v163 = vunpack.c.l.b16 %v78
    %v164 = vunpack.c.h.b16 %v78
    %v165 = vunpack.c.l.b16 %v79
    %v166 = vunpack.c.h.b16 %v79
    %v167 = vunpack.c.l.b16 %v80
    %v168 = vunpack.c.h.b16 %v80
    %v169 = vunpack.c.l.b16 %v81
    %v170 = vunpack.c.h.b16 %v81
    %v171 = vunpack.c.l.b16 %v82
    %v172 = vunpack.c.h.b16 %v82
    %v173 = vunpack.c.l.b16 %v83
    %v174 = vunpack.c.h.b16 %v83
    %v175 = vunpack.c.l.b16 %v84
    %v176 = vunpack.c.h.b16 %v84
    %v177 = vunpack.c.l.b16 %v85
    %v178 = vunpack.c.h.b16 %v85
    %v179 = vunpack.c.l.b16 %v86
    %v180 = vunpack.c.h.b16 %v86
    %v181 = vunpack.c.l.b16 %v87
    %v182 = vunpack.c.h.b16 %v87
    %v183 = vunpack.c.l.b16 %v88
    %v184 = vunpack.c.h.b16 %v88
    %v185 = vpack.c.b16 %v125, %v121
    %v186 = vpack.c.b16 %v126, %v122
    %v187 = vpack.c.b16 %v127, %v123
    %v188 = vpack.c.b16 %v128, %v124
    %v189 = vpack.c.b16 %v133, %v129
    %v190 = vpack.c.b16 %v134, %v130
    %v191 = vpack.c.b16 %v135, %v131
    %v192 = vpack.c.b16 %v136, %v132
    %v193 = vpack.c.b16 %v141, %v137
    %v194 = vpack.c.b16 %v142, %v138
    %v195 = vpack.c.b16 %v143, %v139
    %v196 = vpack.c.b16 %v144, %v140
    %v197 = vpack.c.b16 %v149, %v145
    %v198 = vpack.c.b16 %v150, %v146
    %v199 = vpack.c.b16 %v151, %v147
    %v200 = vpack.c.b16 %v152, %v148
    %v201 = vpack.c.b16 %v157, %v153
    %v202 = vpack.c.b16 %v158, %v154
    %v203 = vpack.c.b16 %v159, %v155
    %v204 = vpack.c.b16 %v160, %v156
    %v205 = vpack.c.b16 %v165, %v161
    %v206 = vpack.c.b16 %v166, %v162
    %v207 = vpack.c.b16 %v167, %v163
    %v208 = vpack.c.b16 %v168, %v164
    %v209 = vpack.c.b16 %v173, %v169
    %v210 = vpack.c.b16 %v174, %v170
    %v211 = vpack.c.b16 %v175, %v171
    %v212 = vpack.c.b16 %v176, %v172
    %v213 = vpack.c.b16 %v181, %v177
    %v214 = vpack.c.b16 %v182, %v178
    %v215 = vpack.c.b16 %v183, %v179
    %v216 = vpack.c.b16 %v184, %v180
    %249 = vmatpush.bf16.msra.mxu0 %v213
    %250 = vmatpush.bf16.msra.mxu0 %v209
    %251 = vmatpush.bf16.msra.mxu0 %v205
    %252 = vmatpush.bf16.msra.mxu0 %v201
    %253 = vmatpush.bf16.msra.mxu0 %v197
    %254 = vmatpush.bf16.msra.mxu0 %v193
    %255 = vmatpush.bf16.msra.mxu0 %v189
    %256 = vmatpush.bf16.msra.mxu0 %v185
    %257 = vmatmul.bf16.gmra.mxu0 %v56
    %v258 = vpop.f32.mrf.mxu0
    %v259 = vadd.f32 0.0, %v258
    %v260 = vpop.f32.mrf.mxu0
    %261 = vdwg.mxu0
    %262 = vmatpush.bf16.msra.mxu0 %v214
    %263 = vmatpush.bf16.msra.mxu0 %v210
    %264 = vmatpush.bf16.msra.mxu0 %v206
    %265 = vmatpush.bf16.msra.mxu0 %v202
    %266 = vmatpush.bf16.msra.mxu0 %v198
    %267 = vmatpush.bf16.msra.mxu0 %v194
    %268 = vmatpush.bf16.msra.mxu0 %v190
    %269 = vmatpush.bf16.msra.mxu0 %v186
    %270 = vmatmul.bf16.gmra.mxu0 %v56
    %v271 = vpop.f32.mrf.mxu0
    %v272 = vadd.f32 0.0, %v271
    %v273 = vpop.f32.mrf.mxu0
    %274 = vdwg.mxu0
    %275 = vmatpush.bf16.msra.mxu0 %v215
    %276 = vmatpush.bf16.msra.mxu0 %v211
    %277 = vmatpush.bf16.msra.mxu0 %v207
    %278 = vmatpush.bf16.msra.mxu0 %v203
    %279 = vmatpush.bf16.msra.mxu0 %v199
    %280 = vmatpush.bf16.msra.mxu0 %v195
    %281 = vmatpush.bf16.msra.mxu0 %v191
    %282 = vmatpush.bf16.msra.mxu0 %v187
    %283 = vmatmul.bf16.gmra.mxu0 %v56
    %v284 = vpop.f32.mrf.mxu0
    %v285 = vadd.f32 0.0, %v284
    %v286 = vpop.f32.mrf.mxu0
    %287 = vdwg.mxu0
    %288 = vmatpush.bf16.msra.mxu0 %v216
    %289 = vmatpush.bf16.msra.mxu0 %v212
    %290 = vmatpush.bf16.msra.mxu0 %v208
    %291 = vmatpush.bf16.msra.mxu0 %v204
    %292 = vmatpush.bf16.msra.mxu0 %v200
    %293 = vmatpush.bf16.msra.mxu0 %v196
    %294 = vmatpush.bf16.msra.mxu0 %v192
    %295 = vmatpush.bf16.msra.mxu0 %v188
    %296 = vmatmul.bf16.gmra.mxu0 %v56
    %v297 = vpop.f32.mrf.mxu0
    %v298 = vadd.f32 0.0, %v297
    %v299 = vpop.f32.mrf.mxu0
    %300 = vdwg.mxu0
    %v305 = vrot.slane %v272, 6
    %v306 = vrot.slane %v285, 4
    %v307 = vrot.slane %v298, 2
    %vm308 = vcmask 1041408
    %v309 = vsel %vm308, %v259, %v305
    %vm310 = vcmask 1045508
    %v311 = vsel %vm310, %v306, %v307
    %vm312 = vcmask 1043456
    %v313 = vsel %vm312, %v309, %v311
    %v315 = vadd.f32 %v55, %v313
    %v316 = vxor.u32 %v315, 2147483648
    %v317 = vmul.f32 %v316, 1.442695
    %v318 = vpow.pop %v317
    %v319 = vadd.f32 %v318, 1.0
    %v320 = vrcp.pop %v319
    %v321 = vmul.f32 %v319, %v320
    %v322 = vsub.f32 1.0, %v321
    %v323 = vmul.f32 %v320, %v322
    %v324 = vadd.f32 %v320, %v323
    %vm325 = vweird.f32 %v319
    %vm326 = vweird.f32 %v320
    %vm327 = vmor %vm325, %vm326
    %v328 = vsel %vm327, %v320, %v324
    %v329 = vand.u32 2147483647, %v319
    %vm330 = vcmp.eq.f32.partialorder %v329, 8.507059e+37
    %v331 = vand.u32 %v319, 2147483648
    %v332 = vor.u32 1.1754944e-38, %v331
    %v333 = vsel %vm330, %v332, %v328
    %v334 = vmul.f32 1.0, %v333
    %v336 = vrot.slane %v315, 2
    %v338 = vxor.u32 %v336, 2147483648
    %v339 = vmul.f32 %v338, 1.442695
    %v340 = vpow.pop %v339
    %v341 = vadd.f32 %v340, 1.0
    %v342 = vrcp.pop %v341
    %v343 = vmul.f32 %v341, %v342
    %v344 = vsub.f32 1.0, %v343
    %v345 = vmul.f32 %v342, %v344
    %v346 = vadd.f32 %v342, %v345
    %vm347 = vweird.f32 %v341
    %vm348 = vweird.f32 %v342
    %vm349 = vmor %vm347, %vm348
    %v350 = vsel %vm349, %v342, %v346
    %v351 = vand.u32 2147483647, %v341
    %vm352 = vcmp.eq.f32.partialorder %v351, 8.507059e+37
    %v353 = vand.u32 %v341, 2147483648
    %v354 = vor.u32 1.1754944e-38, %v353
    %v355 = vsel %vm352, %v354, %v350
    %v356 = vmul.f32 1.0, %v355
    %v357 = vrot.slane %v315, 4
    %v359 = vtanh.pop %v357
    %v360 = vrot.slane %v315, 6
    %v362 = vxor.u32 %v360, 2147483648
    %v363 = vmul.f32 %v362, 1.442695
    %v364 = vpow.pop %v363
    %v365 = vadd.f32 %v364, 1.0
    %v366 = vrcp.pop %v365
    %v367 = vmul.f32 %v365, %v366
    %v368 = vsub.f32 1.0, %v367
    %v369 = vmul.f32 %v366, %v368
    %v370 = vadd.f32 %v366, %v369
    %vm371 = vweird.f32 %v365
    %vm372 = vweird.f32 %v366
    %vm373 = vmor %vm371, %vm372
    %v374 = vsel %vm373, %v366, %v370
    %v375 = vand.u32 2147483647, %v365
    %vm376 = vcmp.eq.f32.partialorder %v375, 8.507059e+37
    %v377 = vand.u32 %v365, 2147483648
    %v378 = vor.u32 1.1754944e-38, %v377
    %v379 = vsel %vm376, %v378, %v374
    %v380 = vmul.f32 1.0, %v379
    %v381 = vmul.f32 %v356, %v54
    %v382 = vmul.f32 %v334, %v359
    %v383 = vadd.f32 %v381, %v382
    %v384 = vtanh.pop %v383
    %v385 = vmul.f32 %v380, %v384
    %386 = vst [vmem:[#allocation9] sm:$0x3] %v385
    %s387 = scalar_lea.vmem [#allocation4], 8
    %v388 = vld [vmem:[%s387] sm:$0xff]
    %v389 = vpack.c.bf16 %v385, %v385
    %v390 = vld [vmem:[#allocation7] sm:$0xff]
    %v391 = vld [vmem:[#allocation7 + $0x8] sm:$0xff]
    %v392 = vld [vmem:[#allocation7 + $0x10] sm:$0xff]
    %v393 = vld [vmem:[#allocation7 + $0x18] sm:$0xff]
    %v394 = vld [vmem:[#allocation7 + $0x20] sm:$0xff]
    %v395 = vld [vmem:[#allocation7 + $0x28] sm:$0xff]
    %v396 = vld [vmem:[#allocation7 + $0x30] sm:$0xff]
    %v397 = vld [vmem:[#allocation7 + $0x38] sm:$0xff]
    %v398 = vld [vmem:[#allocation7 + $0x40] sm:$0xff]
    %v399 = vld [vmem:[#allocation7 + $0x48] sm:$0xff]
    %v400 = vld [vmem:[#allocation7 + $0x50] sm:$0xff]
    %v401 = vld [vmem:[#allocation7 + $0x58] sm:$0xff]
    %v402 = vld [vmem:[#allocation7 + $0x60] sm:$0xff]
    %v403 = vld [vmem:[#allocation7 + $0x68] sm:$0xff]
    %v404 = vld [vmem:[#allocation7 + $0x70] sm:$0xff]
    %v405 = vld [vmem:[#allocation7 + $0x78] sm:$0xff]
    %v406 = vld [vmem:[#allocation7 + $0x80] sm:$0xff]
    %v407 = vld [vmem:[#allocation7 + $0x88] sm:$0xff]
    %v408 = vld [vmem:[#allocation7 + $0x90] sm:$0xff]
    %v409 = vld [vmem:[#allocation7 + $0x98] sm:$0xff]
    %v410 = vld [vmem:[#allocation7 + $0xa0] sm:$0xff]
    %v411 = vld [vmem:[#allocation7 + $0xa8] sm:$0xff]
    %v412 = vld [vmem:[#allocation7 + $0xb0] sm:$0xff]
    %v413 = vld [vmem:[#allocation7 + $0xb8] sm:$0xff]
    %v414 = vld [vmem:[#allocation7 + $0xc0] sm:$0xff]
    %v415 = vld [vmem:[#allocation7 + $0xc8] sm:$0xff]
    %v416 = vld [vmem:[#allocation7 + $0xd0] sm:$0xff]
    %v417 = vld [vmem:[#allocation7 + $0xd8] sm:$0xff]
    %v418 = vld [vmem:[#allocation7 + $0xe0] sm:$0xff]
    %v419 = vld [vmem:[#allocation7 + $0xe8] sm:$0xff]
    %v420 = vld [vmem:[#allocation7 + $0xf0] sm:$0xff]
    %v421 = vld [vmem:[#allocation7 + $0xf8] sm:$0xff]
    %v454 = vunpack.c.l.b16 %v390
    %v455 = vunpack.c.h.b16 %v390
    %v456 = vunpack.c.l.b16 %v391
    %v457 = vunpack.c.h.b16 %v391
    %v458 = vunpack.c.l.b16 %v392
    %v459 = vunpack.c.h.b16 %v392
    %v460 = vunpack.c.l.b16 %v393
    %v461 = vunpack.c.h.b16 %v393
    %v462 = vunpack.c.l.b16 %v394
    %v463 = vunpack.c.h.b16 %v394
    %v464 = vunpack.c.l.b16 %v395
    %v465 = vunpack.c.h.b16 %v395
    %v466 = vunpack.c.l.b16 %v396
    %v467 = vunpack.c.h.b16 %v396
    %v468 = vunpack.c.l.b16 %v397
    %v469 = vunpack.c.h.b16 %v397
    %v470 = vunpack.c.l.b16 %v398
    %v471 = vunpack.c.h.b16 %v398
    %v472 = vunpack.c.l.b16 %v399
    %v473 = vunpack.c.h.b16 %v399
    %v474 = vunpack.c.l.b16 %v400
    %v475 = vunpack.c.h.b16 %v400
    %v476 = vunpack.c.l.b16 %v401
    %v477 = vunpack.c.h.b16 %v401
    %v478 = vunpack.c.l.b16 %v402
    %v479 = vunpack.c.h.b16 %v402
    %v480 = vunpack.c.l.b16 %v403
    %v481 = vunpack.c.h.b16 %v403
    %v482 = vunpack.c.l.b16 %v404
    %v483 = vunpack.c.h.b16 %v404
    %v484 = vunpack.c.l.b16 %v405
    %v485 = vunpack.c.h.b16 %v405
    %v486 = vunpack.c.l.b16 %v406
    %v487 = vunpack.c.h.b16 %v406
    %v488 = vunpack.c.l.b16 %v407
    %v489 = vunpack.c.h.b16 %v407
    %v490 = vunpack.c.l.b16 %v408
    %v491 = vunpack.c.h.b16 %v408
    %v492 = vunpack.c.l.b16 %v409
    %v493 = vunpack.c.h.b16 %v409
    %v494 = vunpack.c.l.b16 %v410
    %v495 = vunpack.c.h.b16 %v410
    %v496 = vunpack.c.l.b16 %v411
    %v497 = vunpack.c.h.b16 %v411
    %v498 = vunpack.c.l.b16 %v412
    %v499 = vunpack.c.h.b16 %v412
    %v500 = vunpack.c.l.b16 %v413
    %v501 = vunpack.c.h.b16 %v413
    %v502 = vunpack.c.l.b16 %v414
    %v503 = vunpack.c.h.b16 %v414
    %v504 = vunpack.c.l.b16 %v415
    %v505 = vunpack.c.h.b16 %v415
    %v506 = vunpack.c.l.b16 %v416
    %v507 = vunpack.c.h.b16 %v416
    %v508 = vunpack.c.l.b16 %v417
    %v509 = vunpack.c.h.b16 %v417
    %v510 = vunpack.c.l.b16 %v418
    %v511 = vunpack.c.h.b16 %v418
    %v512 = vunpack.c.l.b16 %v419
    %v513 = vunpack.c.h.b16 %v419
    %v514 = vunpack.c.l.b16 %v420
    %v515 = vunpack.c.h.b16 %v420
    %v516 = vunpack.c.l.b16 %v421
    %v517 = vunpack.c.h.b16 %v421
    %v518 = vpack.c.b16 %v458, %v454
    %v519 = vpack.c.b16 %v459, %v455
    %v520 = vpack.c.b16 %v460, %v456
    %v521 = vpack.c.b16 %v461, %v457
    %v522 = vpack.c.b16 %v466, %v462
    %v523 = vpack.c.b16 %v467, %v463
    %v524 = vpack.c.b16 %v468, %v464
    %v525 = vpack.c.b16 %v469, %v465
    %v526 = vpack.c.b16 %v474, %v470
    %v527 = vpack.c.b16 %v475, %v471
    %v528 = vpack.c.b16 %v476, %v472
    %v529 = vpack.c.b16 %v477, %v473
    %v530 = vpack.c.b16 %v482, %v478
    %v531 = vpack.c.b16 %v483, %v479
    %v532 = vpack.c.b16 %v484, %v480
    %v533 = vpack.c.b16 %v485, %v481
    %v534 = vpack.c.b16 %v490, %v486
    %v535 = vpack.c.b16 %v491, %v487
    %v536 = vpack.c.b16 %v492, %v488
    %v537 = vpack.c.b16 %v493, %v489
    %v538 = vpack.c.b16 %v498, %v494
    %v539 = vpack.c.b16 %v499, %v495
    %v540 = vpack.c.b16 %v500, %v496
    %v541 = vpack.c.b16 %v501, %v497
    %v542 = vpack.c.b16 %v506, %v502
    %v543 = vpack.c.b16 %v507, %v503
    %v544 = vpack.c.b16 %v508, %v504
    %v545 = vpack.c.b16 %v509, %v505
    %v546 = vpack.c.b16 %v514, %v510
    %v547 = vpack.c.b16 %v515, %v511
    %v548 = vpack.c.b16 %v516, %v512
    %v549 = vpack.c.b16 %v517, %v513
    %582 = vmatpush.bf16.msra.mxu0 %v546
    %583 = vmatpush.bf16.msra.mxu0 %v542
    %584 = vmatpush.bf16.msra.mxu0 %v538
    %585 = vmatpush.bf16.msra.mxu0 %v534
    %586 = vmatpush.bf16.msra.mxu0 %v530
    %587 = vmatpush.bf16.msra.mxu0 %v526
    %588 = vmatpush.bf16.msra.mxu0 %v522
    %589 = vmatpush.bf16.msra.mxu0 %v518
    %590 = vmatmul.bf16.gmra.mxu0 %v389
    %v591 = vpop.f32.mrf.mxu0
    %v592 = vadd.f32 0.0, %v591
    %v593 = vpop.f32.mrf.mxu0
    %594 = vdwg.mxu0
    %595 = vmatpush.bf16.msra.mxu0 %v547
    %596 = vmatpush.bf16.msra.mxu0 %v543
    %597 = vmatpush.bf16.msra.mxu0 %v539
    %598 = vmatpush.bf16.msra.mxu0 %v535
    %599 = vmatpush.bf16.msra.mxu0 %v531
    %600 = vmatpush.bf16.msra.mxu0 %v527
    %601 = vmatpush.bf16.msra.mxu0 %v523
    %602 = vmatpush.bf16.msra.mxu0 %v519
    %603 = vmatmul.bf16.gmra.mxu0 %v389
    %v604 = vpop.f32.mrf.mxu0
    %v605 = vadd.f32 0.0, %v604
    %v606 = vpop.f32.mrf.mxu0
    %607 = vdwg.mxu0
    %608 = vmatpush.bf16.msra.mxu0 %v548
    %609 = vmatpush.bf16.msra.mxu0 %v544
    %610 = vmatpush.bf16.msra.mxu0 %v540
    %611 = vmatpush.bf16.msra.mxu0 %v536
    %612 = vmatpush.bf16.msra.mxu0 %v532
    %613 = vmatpush.bf16.msra.mxu0 %v528
    %614 = vmatpush.bf16.msra.mxu0 %v524
    %615 = vmatpush.bf16.msra.mxu0 %v520
    %616 = vmatmul.bf16.gmra.mxu0 %v389
    %v617 = vpop.f32.mrf.mxu0
    %v618 = vadd.f32 0.0, %v617
    %v619 = vpop.f32.mrf.mxu0
    %620 = vdwg.mxu0
    %621 = vmatpush.bf16.msra.mxu0 %v549
    %622 = vmatpush.bf16.msra.mxu0 %v545
    %623 = vmatpush.bf16.msra.mxu0 %v541
    %624 = vmatpush.bf16.msra.mxu0 %v537
    %625 = vmatpush.bf16.msra.mxu0 %v533
    %626 = vmatpush.bf16.msra.mxu0 %v529
    %627 = vmatpush.bf16.msra.mxu0 %v525
    %628 = vmatpush.bf16.msra.mxu0 %v521
    %629 = vmatmul.bf16.gmra.mxu0 %v389
    %v630 = vpop.f32.mrf.mxu0
    %v631 = vadd.f32 0.0, %v630
    %v632 = vpop.f32.mrf.mxu0
    %633 = vdwg.mxu0
    %v638 = vrot.slane %v605, 6
    %v639 = vrot.slane %v618, 4
    %v640 = vrot.slane %v631, 2
    %v641 = vsel %vm308, %v592, %v638
    %v642 = vsel %vm310, %v639, %v640
    %v643 = vsel %vm312, %v641, %v642
    %v645 = vadd.f32 %v388, %v643
    %v646 = vxor.u32 %v645, 2147483648
    %v647 = vmul.f32 %v646, 1.442695
    %v648 = vpow.pop %v647
    %v649 = vadd.f32 %v648, 1.0
    %v650 = vrcp.pop %v649
    %v651 = vmul.f32 %v649, %v650
    %v652 = vsub.f32 1.0, %v651
    %v653 = vmul.f32 %v650, %v652
    %v654 = vadd.f32 %v650, %v653
    %vm655 = vweird.f32 %v649
    %vm656 = vweird.f32 %v650
    %vm657 = vmor %vm655, %vm656
    %v658 = vsel %vm657, %v650, %v654
    %v659 = vand.u32 2147483647, %v649
    %vm660 = vcmp.eq.f32.partialorder %v659, 8.507059e+37
    %v661 = vand.u32 %v649, 2147483648
    %v662 = vor.u32 1.1754944e-38, %v661
    %v663 = vsel %vm660, %v662, %v658
    %v664 = vmul.f32 1.0, %v663
    %v666 = vrot.slane %v645, 2
    %v668 = vxor.u32 %v666, 2147483648
    %v669 = vmul.f32 %v668, 1.442695
    %v670 = vpow.pop %v669
    %v671 = vadd.f32 %v670, 1.0
    %v672 = vrcp.pop %v671
    %v673 = vmul.f32 %v671, %v672
    %v674 = vsub.f32 1.0, %v673
    %v675 = vmul.f32 %v672, %v674
    %v676 = vadd.f32 %v672, %v675
    %vm677 = vweird.f32 %v671
    %vm678 = vweird.f32 %v672
    %vm679 = vmor %vm677, %vm678
    %v680 = vsel %vm679, %v672, %v676
    %v681 = vand.u32 2147483647, %v671
    %vm682 = vcmp.eq.f32.partialorder %v681, 8.507059e+37
    %v683 = vand.u32 %v671, 2147483648
    %v684 = vor.u32 1.1754944e-38, %v683
    %v685 = vsel %vm682, %v684, %v680
    %v686 = vmul.f32 1.0, %v685
    %v687 = vrot.slane %v645, 4
    %v689 = vtanh.pop %v687
    %v690 = vrot.slane %v645, 6
    %v692 = vxor.u32 %v690, 2147483648
    %v693 = vmul.f32 %v692, 1.442695
    %v694 = vpow.pop %v693
    %v695 = vadd.f32 %v694, 1.0
    %v696 = vrcp.pop %v695
    %v697 = vmul.f32 %v695, %v696
    %v698 = vsub.f32 1.0, %v697
    %v699 = vmul.f32 %v696, %v698
    %v700 = vadd.f32 %v696, %v699
    %vm701 = vweird.f32 %v695
    %vm702 = vweird.f32 %v696
    %vm703 = vmor %vm701, %vm702
    %v704 = vsel %vm703, %v696, %v700
    %v705 = vand.u32 2147483647, %v695
    %vm706 = vcmp.eq.f32.partialorder %v705, 8.507059e+37
    %v707 = vand.u32 %v695, 2147483648
    %v708 = vor.u32 1.1754944e-38, %v707
    %v709 = vsel %vm706, %v708, %v704
    %v710 = vmul.f32 1.0, %v709
    %v711 = vmul.f32 %v686, %v383
    %v712 = vmul.f32 %v664, %v689
    %v713 = vadd.f32 %v711, %v712
    %v714 = vtanh.pop %v713
    %v715 = vmul.f32 %v710, %v714
    %s716 = scalar_lea.vmem [#allocation9], 2
    %717 = vst [vmem:[%s716] sm:$0x3] %v715
    %s718 = scalar_lea.vmem [#allocation4], 16
    %v719 = vld [vmem:[%s718] sm:$0xff]
    %v720 = vpack.c.bf16 %v715, %v715
    %v721 = vld [vmem:[#allocation7] sm:$0xff]
    %v722 = vld [vmem:[#allocation7 + $0x8] sm:$0xff]
    %v723 = vld [vmem:[#allocation7 + $0x10] sm:$0xff]
    %v724 = vld [vmem:[#allocation7 + $0x18] sm:$0xff]
    %v725 = vld [vmem:[#allocation7 + $0x20] sm:$0xff]
    %v726 = vld [vmem:[#allocation7 + $0x28] sm:$0xff]
    %v727 = vld [vmem:[#allocation7 + $0x30] sm:$0xff]
    %v728 = vld [vmem:[#allocation7 + $0x38] sm:$0xff]
    %v729 = vld [vmem:[#allocation7 + $0x40] sm:$0xff]
    %v730 = vld [vmem:[#allocation7 + $0x48] sm:$0xff]
    %v731 = vld [vmem:[#allocation7 + $0x50] sm:$0xff]
    %v732 = vld [vmem:[#allocation7 + $0x58] sm:$0xff]
    %v733 = vld [vmem:[#allocation7 + $0x60] sm:$0xff]
    %v734 = vld [vmem:[#allocation7 + $0x68] sm:$0xff]
    %v735 = vld [vmem:[#allocation7 + $0x70] sm:$0xff]
    %v736 = vld [vmem:[#allocation7 + $0x78] sm:$0xff]
    %v737 = vld [vmem:[#allocation7 + $0x80] sm:$0xff]
    %v738 = vld [vmem:[#allocation7 + $0x88] sm:$0xff]
    %v739 = vld [vmem:[#allocation7 + $0x90] sm:$0xff]
    %v740 = vld [vmem:[#allocation7 + $0x98] sm:$0xff]
    %v741 = vld [vmem:[#allocation7 + $0xa0] sm:$0xff]
    %v742 = vld [vmem:[#allocation7 + $0xa8] sm:$0xff]
    %v743 = vld [vmem:[#allocation7 + $0xb0] sm:$0xff]
    %v744 = vld [vmem:[#allocation7 + $0xb8] sm:$0xff]
    %v745 = vld [vmem:[#allocation7 + $0xc0] sm:$0xff]
    %v746 = vld [vmem:[#allocation7 + $0xc8] sm:$0xff]
    %v747 = vld [vmem:[#allocation7 + $0xd0] sm:$0xff]
    %v748 = vld [vmem:[#allocation7 + $0xd8] sm:$0xff]
    %v749 = vld [vmem:[#allocation7 + $0xe0] sm:$0xff]
    %v750 = vld [vmem:[#allocation7 + $0xe8] sm:$0xff]
    %v751 = vld [vmem:[#allocation7 + $0xf0] sm:$0xff]
    %v752 = vld [vmem:[#allocation7 + $0xf8] sm:$0xff]
    %v785 = vunpack.c.l.b16 %v721
    %v786 = vunpack.c.h.b16 %v721
    %v787 = vunpack.c.l.b16 %v722
    %v788 = vunpack.c.h.b16 %v722
    %v789 = vunpack.c.l.b16 %v723
    %v790 = vunpack.c.h.b16 %v723
    %v791 = vunpack.c.l.b16 %v724
    %v792 = vunpack.c.h.b16 %v724
    %v793 = vunpack.c.l.b16 %v725
    %v794 = vunpack.c.h.b16 %v725
    %v795 = vunpack.c.l.b16 %v726
    %v796 = vunpack.c.h.b16 %v726
    %v797 = vunpack.c.l.b16 %v727
    %v798 = vunpack.c.h.b16 %v727
    %v799 = vunpack.c.l.b16 %v728
    %v800 = vunpack.c.h.b16 %v728
    %v801 = vunpack.c.l.b16 %v729
    %v802 = vunpack.c.h.b16 %v729
    %v803 = vunpack.c.l.b16 %v730
    %v804 = vunpack.c.h.b16 %v730
    %v805 = vunpack.c.l.b16 %v731
    %v806 = vunpack.c.h.b16 %v731
    %v807 = vunpack.c.l.b16 %v732
    %v808 = vunpack.c.h.b16 %v732
    %v809 = vunpack.c.l.b16 %v733
    %v810 = vunpack.c.h.b16 %v733
    %v811 = vunpack.c.l.b16 %v734
    %v812 = vunpack.c.h.b16 %v734
    %v813 = vunpack.c.l.b16 %v735
    %v814 = vunpack.c.h.b16 %v735
    %v815 = vunpack.c.l.b16 %v736
    %v816 = vunpack.c.h.b16 %v736
    %v817 = vunpack.c.l.b16 %v737
    %v818 = vunpack.c.h.b16 %v737
    %v819 = vunpack.c.l.b16 %v738
    %v820 = vunpack.c.h.b16 %v738
    %v821 = vunpack.c.l.b16 %v739
    %v822 = vunpack.c.h.b16 %v739
    %v823 = vunpack.c.l.b16 %v740
    %v824 = vunpack.c.h.b16 %v740
    %v825 = vunpack.c.l.b16 %v741
    %v826 = vunpack.c.h.b16 %v741
    %v827 = vunpack.c.l.b16 %v742
    %v828 = vunpack.c.h.b16 %v742
    %v829 = vunpack.c.l.b16 %v743
    %v830 = vunpack.c.h.b16 %v743
    %v831 = vunpack.c.l.b16 %v744
    %v832 = vunpack.c.h.b16 %v744
    %v833 = vunpack.c.l.b16 %v745
    %v834 = vunpack.c.h.b16 %v745
    %v835 = vunpack.c.l.b16 %v746
    %v836 = vunpack.c.h.b16 %v746
    %v837 = vunpack.c.l.b16 %v747
    %v838 = vunpack.c.h.b16 %v747
    %v839 = vunpack.c.l.b16 %v748
    %v840 = vunpack.c.h.b16 %v748
    %v841 = vunpack.c.l.b16 %v749
    %v842 = vunpack.c.h.b16 %v749
    %v843 = vunpack.c.l.b16 %v750
    %v844 = vunpack.c.h.b16 %v750
    %v845 = vunpack.c.l.b16 %v751
    %v846 = vunpack.c.h.b16 %v751
    %v847 = vunpack.c.l.b16 %v752
    %v848 = vunpack.c.h.b16 %v752
    %v849 = vpack.c.b16 %v789, %v785
    %v850 = vpack.c.b16 %v790, %v786
    %v851 = vpack.c.b16 %v791, %v787
    %v852 = vpack.c.b16 %v792, %v788
    %v853 = vpack.c.b16 %v797, %v793
    %v854 = vpack.c.b16 %v798, %v794
    %v855 = vpack.c.b16 %v799, %v795
    %v856 = vpack.c.b16 %v800, %v796
    %v857 = vpack.c.b16 %v805, %v801
    %v858 = vpack.c.b16 %v806, %v802
    %v859 = vpack.c.b16 %v807, %v803
    %v860 = vpack.c.b16 %v808, %v804
    %v861 = vpack.c.b16 %v813, %v809
    %v862 = vpack.c.b16 %v814, %v810
    %v863 = vpack.c.b16 %v815, %v811
    %v864 = vpack.c.b16 %v816, %v812
    %v865 = vpack.c.b16 %v821, %v817
    %v866 = vpack.c.b16 %v822, %v818
    %v867 = vpack.c.b16 %v823, %v819
    %v868 = vpack.c.b16 %v824, %v820
    %v869 = vpack.c.b16 %v829, %v825
    %v870 = vpack.c.b16 %v830, %v826
    %v871 = vpack.c.b16 %v831, %v827
    %v872 = vpack.c.b16 %v832, %v828
    %v873 = vpack.c.b16 %v837, %v833
    %v874 = vpack.c.b16 %v838, %v834
    %v875 = vpack.c.b16 %v839, %v835
    %v876 = vpack.c.b16 %v840, %v836
    %v877 = vpack.c.b16 %v845, %v841
    %v878 = vpack.c.b16 %v846, %v842
    %v879 = vpack.c.b16 %v847, %v843
    %v880 = vpack.c.b16 %v848, %v844
    %913 = vmatpush.bf16.msra.mxu0 %v877
    %914 = vmatpush.bf16.msra.mxu0 %v873
    %915 = vmatpush.bf16.msra.mxu0 %v869
    %916 = vmatpush.bf16.msra.mxu0 %v865
    %917 = vmatpush.bf16.msra.mxu0 %v861
    %918 = vmatpush.bf16.msra.mxu0 %v857
    %919 = vmatpush.bf16.msra.mxu0 %v853
    %920 = vmatpush.bf16.msra.mxu0 %v849
    %921 = vmatmul.bf16.gmra.mxu0 %v720
    %v922 = vpop.f32.mrf.mxu0
    %v923 = vadd.f32 0.0, %v922
    %v924 = vpop.f32.mrf.mxu0
    %925 = vdwg.mxu0
    %926 = vmatpush.bf16.msra.mxu0 %v878
    %927 = vmatpush.bf16.msra.mxu0 %v874
    %928 = vmatpush.bf16.msra.mxu0 %v870
    %929 = vmatpush.bf16.msra.mxu0 %v866
    %930 = vmatpush.bf16.msra.mxu0 %v862
    %931 = vmatpush.bf16.msra.mxu0 %v858
    %932 = vmatpush.bf16.msra.mxu0 %v854
    %933 = vmatpush.bf16.msra.mxu0 %v850
    %934 = vmatmul.bf16.gmra.mxu0 %v720
    %v935 = vpop.f32.mrf.mxu0
    %v936 = vadd.f32 0.0, %v935
    %v937 = vpop.f32.mrf.mxu0
    %938 = vdwg.mxu0
    %939 = vmatpush.bf16.msra.mxu0 %v879
    %940 = vmatpush.bf16.msra.mxu0 %v875
    %941 = vmatpush.bf16.msra.mxu0 %v871
    %942 = vmatpush.bf16.msra.mxu0 %v867
    %943 = vmatpush.bf16.msra.mxu0 %v863
    %944 = vmatpush.bf16.msra.mxu0 %v859
    %945 = vmatpush.bf16.msra.mxu0 %v855
    %946 = vmatpush.bf16.msra.mxu0 %v851
    %947 = vmatmul.bf16.gmra.mxu0 %v720
    %v948 = vpop.f32.mrf.mxu0
    %v949 = vadd.f32 0.0, %v948
    %v950 = vpop.f32.mrf.mxu0
    %951 = vdwg.mxu0
    %952 = vmatpush.bf16.msra.mxu0 %v880
    %953 = vmatpush.bf16.msra.mxu0 %v876
    %954 = vmatpush.bf16.msra.mxu0 %v872
    %955 = vmatpush.bf16.msra.mxu0 %v868
    %956 = vmatpush.bf16.msra.mxu0 %v864
    %957 = vmatpush.bf16.msra.mxu0 %v860
    %958 = vmatpush.bf16.msra.mxu0 %v856
    %959 = vmatpush.bf16.msra.mxu0 %v852
    %960 = vmatmul.bf16.gmra.mxu0 %v720
    %v961 = vpop.f32.mrf.mxu0
    %v962 = vadd.f32 0.0, %v961
    %v963 = vpop.f32.mrf.mxu0
    %964 = vdwg.mxu0
    %v969 = vrot.slane %v936, 6
    %v970 = vrot.slane %v949, 4
    %v971 = vrot.slane %v962, 2
    %v972 = vsel %vm308, %v923, %v969
    %v973 = vsel %vm310, %v970, %v971
    %v974 = vsel %vm312, %v972, %v973
    %v976 = vadd.f32 %v719, %v974
    %v977 = vxor.u32 %v976, 2147483648
    %v978 = vmul.f32 %v977, 1.442695
    %v979 = vpow.pop %v978
    %v980 = vadd.f32 %v979, 1.0
    %v981 = vrcp.pop %v980
    %v982 = vmul.f32 %v980, %v981
    %v983 = vsub.f32 1.0, %v982
    %v984 = vmul.f32 %v981, %v983
    %v985 = vadd.f32 %v981, %v984
    %vm986 = vweird.f32 %v980
    %vm987 = vweird.f32 %v981
    %vm988 = vmor %vm986, %vm987
    %v989 = vsel %vm988, %v981, %v985
    %v990 = vand.u32 2147483647, %v980
    %vm991 = vcmp.eq.f32.partialorder %v990, 8.507059e+37
    %v992 = vand.u32 %v980, 2147483648
    %v993 = vor.u32 1.1754944e-38, %v992
    %v994 = vsel %vm991, %v993, %v989
    %v995 = vmul.f32 1.0, %v994
    %v997 = vrot.slane %v976, 2
    %v999 = vxor.u32 %v997, 2147483648
    %v1000 = vmul.f32 %v999, 1.442695
    %v1001 = vpow.pop %v1000
    %v1002 = vadd.f32 %v1001, 1.0
    %v1003 = vrcp.pop %v1002
    %v1004 = vmul.f32 %v1002, %v1003
    %v1005 = vsub.f32 1.0, %v1004
    %v1006 = vmul.f32 %v1003, %v1005
    %v1007 = vadd.f32 %v1003, %v1006
    %vm1008 = vweird.f32 %v1002
    %vm1009 = vweird.f32 %v1003
    %vm1010 = vmor %vm1008, %vm1009
    %v1011 = vsel %vm1010, %v1003, %v1007
    %v1012 = vand.u32 2147483647, %v1002
    %vm1013 = vcmp.eq.f32.partialorder %v1012, 8.507059e+37
    %v1014 = vand.u32 %v1002, 2147483648
    %v1015 = vor.u32 1.1754944e-38, %v1014
    %v1016 = vsel %vm1013, %v1015, %v1011
    %v1017 = vmul.f32 1.0, %v1016
    %v1018 = vrot.slane %v976, 4
    %v1020 = vtanh.pop %v1018
    %v1021 = vrot.slane %v976, 6
    %v1023 = vxor.u32 %v1021, 2147483648
    %v1024 = vmul.f32 %v1023, 1.442695
    %v1025 = vpow.pop %v1024
    %v1026 = vadd.f32 %v1025, 1.0
    %v1027 = vrcp.pop %v1026
    %v1028 = vmul.f32 %v1026, %v1027
    %v1029 = vsub.f32 1.0, %v1028
    %v1030 = vmul.f32 %v1027, %v1029
    %v1031 = vadd.f32 %v1027, %v1030
    %vm1032 = vweird.f32 %v1026
    %vm1033 = vweird.f32 %v1027
    %vm1034 = vmor %vm1032, %vm1033
    %v1035 = vsel %vm1034, %v1027, %v1031
    %v1036 = vand.u32 2147483647, %v1026
    %vm1037 = vcmp.eq.f32.partialorder %v1036, 8.507059e+37
    %v1038 = vand.u32 %v1026, 2147483648
    %v1039 = vor.u32 1.1754944e-38, %v1038
    %v1040 = vsel %vm1037, %v1039, %v1035
    %v1041 = vmul.f32 1.0, %v1040
    %v1042 = vmul.f32 %v1017, %v713
    %v1043 = vmul.f32 %v995, %v1020
    %v1044 = vadd.f32 %v1042, %v1043
    %v1045 = vtanh.pop %v1044
    %v1046 = vmul.f32 %v1041, %v1045
    %s1047 = scalar_lea.vmem [#allocation9], 4
    %1048 = vst [vmem:[%s1047] sm:$0x3] %v1046
    %s1049 = scalar_lea.vmem [#allocation4], 24
    %v1050 = vld [vmem:[%s1049] sm:$0xff]
    %v1051 = vpack.c.bf16 %v1046, %v1046
    %v1052 = vld [vmem:[#allocation7] sm:$0xff]
    %v1053 = vld [vmem:[#allocation7 + $0x8] sm:$0xff]
    %v1054 = vld [vmem:[#allocation7 + $0x10] sm:$0xff]
    %v1055 = vld [vmem:[#allocation7 + $0x18] sm:$0xff]
    %v1056 = vld [vmem:[#allocation7 + $0x20] sm:$0xff]
    %v1057 = vld [vmem:[#allocation7 + $0x28] sm:$0xff]
    %v1058 = vld [vmem:[#allocation7 + $0x30] sm:$0xff]
    %v1059 = vld [vmem:[#allocation7 + $0x38] sm:$0xff]
    %v1060 = vld [vmem:[#allocation7 + $0x40] sm:$0xff]
    %v1061 = vld [vmem:[#allocation7 + $0x48] sm:$0xff]
    %v1062 = vld [vmem:[#allocation7 + $0x50] sm:$0xff]
    %v1063 = vld [vmem:[#allocation7 + $0x58] sm:$0xff]
    %v1064 = vld [vmem:[#allocation7 + $0x60] sm:$0xff]
    %v1065 = vld [vmem:[#allocation7 + $0x68] sm:$0xff]
    %v1066 = vld [vmem:[#allocation7 + $0x70] sm:$0xff]
    %v1067 = vld [vmem:[#allocation7 + $0x78] sm:$0xff]
    %v1068 = vld [vmem:[#allocation7 + $0x80] sm:$0xff]
    %v1069 = vld [vmem:[#allocation7 + $0x88] sm:$0xff]
    %v1070 = vld [vmem:[#allocation7 + $0x90] sm:$0xff]
    %v1071 = vld [vmem:[#allocation7 + $0x98] sm:$0xff]
    %v1072 = vld [vmem:[#allocation7 + $0xa0] sm:$0xff]
    %v1073 = vld [vmem:[#allocation7 + $0xa8] sm:$0xff]
    %v1074 = vld [vmem:[#allocation7 + $0xb0] sm:$0xff]
    %v1075 = vld [vmem:[#allocation7 + $0xb8] sm:$0xff]
    %v1076 = vld [vmem:[#allocation7 + $0xc0] sm:$0xff]
    %v1077 = vld [vmem:[#allocation7 + $0xc8] sm:$0xff]
    %v1078 = vld [vmem:[#allocation7 + $0xd0] sm:$0xff]
    %v1079 = vld [vmem:[#allocation7 + $0xd8] sm:$0xff]
    %v1080 = vld [vmem:[#allocation7 + $0xe0] sm:$0xff]
    %v1081 = vld [vmem:[#allocation7 + $0xe8] sm:$0xff]
    %v1082 = vld [vmem:[#allocation7 + $0xf0] sm:$0xff]
    %v1083 = vld [vmem:[#allocation7 + $0xf8] sm:$0xff]
    %v1116 = vunpack.c.l.b16 %v1052
    %v1117 = vunpack.c.h.b16 %v1052
    %v1118 = vunpack.c.l.b16 %v1053
    %v1119 = vunpack.c.h.b16 %v1053
    %v1120 = vunpack.c.l.b16 %v1054
    %v1121 = vunpack.c.h.b16 %v1054
    %v1122 = vunpack.c.l.b16 %v1055
    %v1123 = vunpack.c.h.b16 %v1055
    %v1124 = vunpack.c.l.b16 %v1056
    %v1125 = vunpack.c.h.b16 %v1056
    %v1126 = vunpack.c.l.b16 %v1057
    %v1127 = vunpack.c.h.b16 %v1057
    %v1128 = vunpack.c.l.b16 %v1058
    %v1129 = vunpack.c.h.b16 %v1058
    %v1130 = vunpack.c.l.b16 %v1059
    %v1131 = vunpack.c.h.b16 %v1059
    %v1132 = vunpack.c.l.b16 %v1060
    %v1133 = vunpack.c.h.b16 %v1060
    %v1134 = vunpack.c.l.b16 %v1061
    %v1135 = vunpack.c.h.b16 %v1061
    %v1136 = vunpack.c.l.b16 %v1062
    %v1137 = vunpack.c.h.b16 %v1062
    %v1138 = vunpack.c.l.b16 %v1063
    %v1139 = vunpack.c.h.b16 %v1063
    %v1140 = vunpack.c.l.b16 %v1064
    %v1141 = vunpack.c.h.b16 %v1064
    %v1142 = vunpack.c.l.b16 %v1065
    %v1143 = vunpack.c.h.b16 %v1065
    %v1144 = vunpack.c.l.b16 %v1066
    %v1145 = vunpack.c.h.b16 %v1066
    %v1146 = vunpack.c.l.b16 %v1067
    %v1147 = vunpack.c.h.b16 %v1067
    %v1148 = vunpack.c.l.b16 %v1068
    %v1149 = vunpack.c.h.b16 %v1068
    %v1150 = vunpack.c.l.b16 %v1069
    %v1151 = vunpack.c.h.b16 %v1069
    %v1152 = vunpack.c.l.b16 %v1070
    %v1153 = vunpack.c.h.b16 %v1070
    %v1154 = vunpack.c.l.b16 %v1071
    %v1155 = vunpack.c.h.b16 %v1071
    %v1156 = vunpack.c.l.b16 %v1072
    %v1157 = vunpack.c.h.b16 %v1072
    %v1158 = vunpack.c.l.b16 %v1073
    %v1159 = vunpack.c.h.b16 %v1073
    %v1160 = vunpack.c.l.b16 %v1074
    %v1161 = vunpack.c.h.b16 %v1074
    %v1162 = vunpack.c.l.b16 %v1075
    %v1163 = vunpack.c.h.b16 %v1075
    %v1164 = vunpack.c.l.b16 %v1076
    %v1165 = vunpack.c.h.b16 %v1076
    %v1166 = vunpack.c.l.b16 %v1077
    %v1167 = vunpack.c.h.b16 %v1077
    %v1168 = vunpack.c.l.b16 %v1078
    %v1169 = vunpack.c.h.b16 %v1078
    %v1170 = vunpack.c.l.b16 %v1079
    %v1171 = vunpack.c.h.b16 %v1079
    %v1172 = vunpack.c.l.b16 %v1080
    %v1173 = vunpack.c.h.b16 %v1080
    %v1174 = vunpack.c.l.b16 %v1081
    %v1175 = vunpack.c.h.b16 %v1081
    %v1176 = vunpack.c.l.b16 %v1082
    %v1177 = vunpack.c.h.b16 %v1082
    %v1178 = vunpack.c.l.b16 %v1083
    %v1179 = vunpack.c.h.b16 %v1083
    %v1180 = vpack.c.b16 %v1120, %v1116
    %v1181 = vpack.c.b16 %v1121, %v1117
    %v1182 = vpack.c.b16 %v1122, %v1118
    %v1183 = vpack.c.b16 %v1123, %v1119
    %v1184 = vpack.c.b16 %v1128, %v1124
    %v1185 = vpack.c.b16 %v1129, %v1125
    %v1186 = vpack.c.b16 %v1130, %v1126
    %v1187 = vpack.c.b16 %v1131, %v1127
    %v1188 = vpack.c.b16 %v1136, %v1132
    %v1189 = vpack.c.b16 %v1137, %v1133
    %v1190 = vpack.c.b16 %v1138, %v1134
    %v1191 = vpack.c.b16 %v1139, %v1135
    %v1192 = vpack.c.b16 %v1144, %v1140
    %v1193 = vpack.c.b16 %v1145, %v1141
    %v1194 = vpack.c.b16 %v1146, %v1142
    %v1195 = vpack.c.b16 %v1147, %v1143
    %v1196 = vpack.c.b16 %v1152, %v1148
    %v1197 = vpack.c.b16 %v1153, %v1149
    %v1198 = vpack.c.b16 %v1154, %v1150
    %v1199 = vpack.c.b16 %v1155, %v1151
    %v1200 = vpack.c.b16 %v1160, %v1156
    %v1201 = vpack.c.b16 %v1161, %v1157
    %v1202 = vpack.c.b16 %v1162, %v1158
    %v1203 = vpack.c.b16 %v1163, %v1159
    %v1204 = vpack.c.b16 %v1168, %v1164
    %v1205 = vpack.c.b16 %v1169, %v1165
    %v1206 = vpack.c.b16 %v1170, %v1166
    %v1207 = vpack.c.b16 %v1171, %v1167
    %v1208 = vpack.c.b16 %v1176, %v1172
    %v1209 = vpack.c.b16 %v1177, %v1173
    %v1210 = vpack.c.b16 %v1178, %v1174
    %v1211 = vpack.c.b16 %v1179, %v1175
    %1244 = vmatpush.bf16.msra.mxu0 %v1208
    %1245 = vmatpush.bf16.msra.mxu0 %v1204
    %1246 = vmatpush.bf16.msra.mxu0 %v1200
    %1247 = vmatpush.bf16.msra.mxu0 %v1196
    %1248 = vmatpush.bf16.msra.mxu0 %v1192
    %1249 = vmatpush.bf16.msra.mxu0 %v1188
    %1250 = vmatpush.bf16.msra.mxu0 %v1184
    %1251 = vmatpush.bf16.msra.mxu0 %v1180
    %1252 = vmatmul.bf16.gmra.mxu0 %v1051
    %v1253 = vpop.f32.mrf.mxu0
    %v1254 = vadd.f32 0.0, %v1253
    %v1255 = vpop.f32.mrf.mxu0
    %1256 = vdwg.mxu0
    %1257 = vmatpush.bf16.msra.mxu0 %v1209
    %1258 = vmatpush.bf16.msra.mxu0 %v1205
    %1259 = vmatpush.bf16.msra.mxu0 %v1201
    %1260 = vmatpush.bf16.msra.mxu0 %v1197
    %1261 = vmatpush.bf16.msra.mxu0 %v1193
    %1262 = vmatpush.bf16.msra.mxu0 %v1189
    %1263 = vmatpush.bf16.msra.mxu0 %v1185
    %1264 = vmatpush.bf16.msra.mxu0 %v1181
    %1265 = vmatmul.bf16.gmra.mxu0 %v1051
    %v1266 = vpop.f32.mrf.mxu0
    %v1267 = vadd.f32 0.0, %v1266
    %v1268 = vpop.f32.mrf.mxu0
    %1269 = vdwg.mxu0
    %1270 = vmatpush.bf16.msra.mxu0 %v1210
    %1271 = vmatpush.bf16.msra.mxu0 %v1206
    %1272 = vmatpush.bf16.msra.mxu0 %v1202
    %1273 = vmatpush.bf16.msra.mxu0 %v1198
    %1274 = vmatpush.bf16.msra.mxu0 %v1194
    %1275 = vmatpush.bf16.msra.mxu0 %v1190
    %1276 = vmatpush.bf16.msra.mxu0 %v1186
    %1277 = vmatpush.bf16.msra.mxu0 %v1182
    %1278 = vmatmul.bf16.gmra.mxu0 %v1051
    %v1279 = vpop.f32.mrf.mxu0
    %v1280 = vadd.f32 0.0, %v1279
    %v1281 = vpop.f32.mrf.mxu0
    %1282 = vdwg.mxu0
    %1283 = vmatpush.bf16.msra.mxu0 %v1211
    %1284 = vmatpush.bf16.msra.mxu0 %v1207
    %1285 = vmatpush.bf16.msra.mxu0 %v1203
    %1286 = vmatpush.bf16.msra.mxu0 %v1199
    %1287 = vmatpush.bf16.msra.mxu0 %v1195
    %1288 = vmatpush.bf16.msra.mxu0 %v1191
    %1289 = vmatpush.bf16.msra.mxu0 %v1187
    %1290 = vmatpush.bf16.msra.mxu0 %v1183
    %1291 = vmatmul.bf16.gmra.mxu0 %v1051
    %v1292 = vpop.f32.mrf.mxu0
    %v1293 = vadd.f32 0.0, %v1292
    %v1294 = vpop.f32.mrf.mxu0
    %1295 = vdwg.mxu0
    %v1300 = vrot.slane %v1267, 6
    %v1301 = vrot.slane %v1280, 4
    %v1302 = vrot.slane %v1293, 2
    %v1303 = vsel %vm308, %v1254, %v1300
    %v1304 = vsel %vm310, %v1301, %v1302
    %v1305 = vsel %vm312, %v1303, %v1304
    %v1307 = vadd.f32 %v1050, %v1305
    %v1308 = vxor.u32 %v1307, 2147483648
    %v1309 = vmul.f32 %v1308, 1.442695
    %v1310 = vpow.pop %v1309
    %v1311 = vadd.f32 %v1310, 1.0
    %v1312 = vrcp.pop %v1311
    %v1313 = vmul.f32 %v1311, %v1312
    %v1314 = vsub.f32 1.0, %v1313
    %v1315 = vmul.f32 %v1312, %v1314
    %v1316 = vadd.f32 %v1312, %v1315
    %vm1317 = vweird.f32 %v1311
    %vm1318 = vweird.f32 %v1312
    %vm1319 = vmor %vm1317, %vm1318
    %v1320 = vsel %vm1319, %v1312, %v1316
    %v1321 = vand.u32 2147483647, %v1311
    %vm1322 = vcmp.eq.f32.partialorder %v1321, 8.507059e+37
    %v1323 = vand.u32 %v1311, 2147483648
    %v1324 = vor.u32 1.1754944e-38, %v1323
    %v1325 = vsel %vm1322, %v1324, %v1320
    %v1326 = vmul.f32 1.0, %v1325
    %v1328 = vrot.slane %v1307, 2
    %v1330 = vxor.u32 %v1328, 2147483648
    %v1331 = vmul.f32 %v1330, 1.442695
    %v1332 = vpow.pop %v1331
    %v1333 = vadd.f32 %v1332, 1.0
    %v1334 = vrcp.pop %v1333
    %v1335 = vmul.f32 %v1333, %v1334
    %v1336 = vsub.f32 1.0, %v1335
    %v1337 = vmul.f32 %v1334, %v1336
    %v1338 = vadd.f32 %v1334, %v1337
    %vm1339 = vweird.f32 %v1333
    %vm1340 = vweird.f32 %v1334
    %vm1341 = vmor %vm1339, %vm1340
    %v1342 = vsel %vm1341, %v1334, %v1338
    %v1343 = vand.u32 2147483647, %v1333
    %vm1344 = vcmp.eq.f32.partialorder %v1343, 8.507059e+37
    %v1345 = vand.u32 %v1333, 2147483648
    %v1346 = vor.u32 1.1754944e-38, %v1345
    %v1347 = vsel %vm1344, %v1346, %v1342
    %v1348 = vmul.f32 1.0, %v1347
    %v1349 = vrot.slane %v1307, 4
    %v1351 = vtanh.pop %v1349
    %v1352 = vrot.slane %v1307, 6
    %v1354 = vxor.u32 %v1352, 2147483648
    %v1355 = vmul.f32 %v1354, 1.442695
    %v1356 = vpow.pop %v1355
    %v1357 = vadd.f32 %v1356, 1.0
    %v1358 = vrcp.pop %v1357
    %v1359 = vmul.f32 %v1357, %v1358
    %v1360 = vsub.f32 1.0, %v1359
    %v1361 = vmul.f32 %v1358, %v1360
    %v1362 = vadd.f32 %v1358, %v1361
    %vm1363 = vweird.f32 %v1357
    %vm1364 = vweird.f32 %v1358
    %vm1365 = vmor %vm1363, %vm1364
    %v1366 = vsel %vm1365, %v1358, %v1362
    %v1367 = vand.u32 2147483647, %v1357
    %vm1368 = vcmp.eq.f32.partialorder %v1367, 8.507059e+37
    %v1369 = vand.u32 %v1357, 2147483648
    %v1370 = vor.u32 1.1754944e-38, %v1369
    %v1371 = vsel %vm1368, %v1370, %v1366
    %v1372 = vmul.f32 1.0, %v1371
    %v1373 = vmul.f32 %v1348, %v1044
    %v1374 = vmul.f32 %v1326, %v1351
    %v1375 = vadd.f32 %v1373, %v1374
    %v1376 = vtanh.pop %v1375
    %v1377 = vmul.f32 %v1372, %v1376
    %s1378 = scalar_lea.vmem [#allocation9], 6
    %1379 = vst [vmem:[%s1378] sm:$0x3] %v1377
    %s1380 = scalar_lea.vmem [#allocation4], 32
    %v1381 = vld [vmem:[%s1380] sm:$0xff]
    %v1382 = vpack.c.bf16 %v1377, %v1377
    %v1383 = vld [vmem:[#allocation7] sm:$0xff]
    %v1384 = vld [vmem:[#allocation7 + $0x8] sm:$0xff]
    %v1385 = vld [vmem:[#allocation7 + $0x10] sm:$0xff]
    %v1386 = vld [vmem:[#allocation7 + $0x18] sm:$0xff]
    %v1387 = vld [vmem:[#allocation7 + $0x20] sm:$0xff]
    %v1388 = vld [vmem:[#allocation7 + $0x28] sm:$0xff]
    %v1389 = vld [vmem:[#allocation7 + $0x30] sm:$0xff]
    %v1390 = vld [vmem:[#allocation7 + $0x38] sm:$0xff]
    %v1391 = vld [vmem:[#allocation7 + $0x40] sm:$0xff]
    %v1392 = vld [vmem:[#allocation7 + $0x48] sm:$0xff]
    %v1393 = vld [vmem:[#allocation7 + $0x50] sm:$0xff]
    %v1394 = vld [vmem:[#allocation7 + $0x58] sm:$0xff]
    %v1395 = vld [vmem:[#allocation7 + $0x60] sm:$0xff]
    %v1396 = vld [vmem:[#allocation7 + $0x68] sm:$0xff]
    %v1397 = vld [vmem:[#allocation7 + $0x70] sm:$0xff]
    %v1398 = vld [vmem:[#allocation7 + $0x78] sm:$0xff]
    %v1399 = vld [vmem:[#allocation7 + $0x80] sm:$0xff]
    %v1400 = vld [vmem:[#allocation7 + $0x88] sm:$0xff]
    %v1401 = vld [vmem:[#allocation7 + $0x90] sm:$0xff]
    %v1402 = vld [vmem:[#allocation7 + $0x98] sm:$0xff]
    %v1403 = vld [vmem:[#allocation7 + $0xa0] sm:$0xff]
    %v1404 = vld [vmem:[#allocation7 + $0xa8] sm:$0xff]
    %v1405 = vld [vmem:[#allocation7 + $0xb0] sm:$0xff]
    %v1406 = vld [vmem:[#allocation7 + $0xb8] sm:$0xff]
    %v1407 = vld [vmem:[#allocation7 + $0xc0] sm:$0xff]
    %v1408 = vld [vmem:[#allocation7 + $0xc8] sm:$0xff]
    %v1409 = vld [vmem:[#allocation7 + $0xd0] sm:$0xff]
    %v1410 = vld [vmem:[#allocation7 + $0xd8] sm:$0xff]
    %v1411 = vld [vmem:[#allocation7 + $0xe0] sm:$0xff]
    %v1412 = vld [vmem:[#allocation7 + $0xe8] sm:$0xff]
    %v1413 = vld [vmem:[#allocation7 + $0xf0] sm:$0xff]
    %v1414 = vld [vmem:[#allocation7 + $0xf8] sm:$0xff]
    %v1447 = vunpack.c.l.b16 %v1383
    %v1448 = vunpack.c.h.b16 %v1383
    %v1449 = vunpack.c.l.b16 %v1384
    %v1450 = vunpack.c.h.b16 %v1384
    %v1451 = vunpack.c.l.b16 %v1385
    %v1452 = vunpack.c.h.b16 %v1385
    %v1453 = vunpack.c.l.b16 %v1386
    %v1454 = vunpack.c.h.b16 %v1386
    %v1455 = vunpack.c.l.b16 %v1387
    %v1456 = vunpack.c.h.b16 %v1387
    %v1457 = vunpack.c.l.b16 %v1388
    %v1458 = vunpack.c.h.b16 %v1388
    %v1459 = vunpack.c.l.b16 %v1389
    %v1460 = vunpack.c.h.b16 %v1389
    %v1461 = vunpack.c.l.b16 %v1390
    %v1462 = vunpack.c.h.b16 %v1390
    %v1463 = vunpack.c.l.b16 %v1391
    %v1464 = vunpack.c.h.b16 %v1391
    %v1465 = vunpack.c.l.b16 %v1392
    %v1466 = vunpack.c.h.b16 %v1392
    %v1467 = vunpack.c.l.b16 %v1393
    %v1468 = vunpack.c.h.b16 %v1393
    %v1469 = vunpack.c.l.b16 %v1394
    %v1470 = vunpack.c.h.b16 %v1394
    %v1471 = vunpack.c.l.b16 %v1395
    %v1472 = vunpack.c.h.b16 %v1395
    %v1473 = vunpack.c.l.b16 %v1396
    %v1474 = vunpack.c.h.b16 %v1396
    %v1475 = vunpack.c.l.b16 %v1397
    %v1476 = vunpack.c.h.b16 %v1397
    %v1477 = vunpack.c.l.b16 %v1398
    %v1478 = vunpack.c.h.b16 %v1398
    %v1479 = vunpack.c.l.b16 %v1399
    %v1480 = vunpack.c.h.b16 %v1399
    %v1481 = vunpack.c.l.b16 %v1400
    %v1482 = vunpack.c.h.b16 %v1400
    %v1483 = vunpack.c.l.b16 %v1401
    %v1484 = vunpack.c.h.b16 %v1401
    %v1485 = vunpack.c.l.b16 %v1402
    %v1486 = vunpack.c.h.b16 %v1402
    %v1487 = vunpack.c.l.b16 %v1403
    %v1488 = vunpack.c.h.b16 %v1403
    %v1489 = vunpack.c.l.b16 %v1404
    %v1490 = vunpack.c.h.b16 %v1404
    %v1491 = vunpack.c.l.b16 %v1405
    %v1492 = vunpack.c.h.b16 %v1405
    %v1493 = vunpack.c.l.b16 %v1406
    %v1494 = vunpack.c.h.b16 %v1406
    %v1495 = vunpack.c.l.b16 %v1407
    %v1496 = vunpack.c.h.b16 %v1407
    %v1497 = vunpack.c.l.b16 %v1408
    %v1498 = vunpack.c.h.b16 %v1408
    %v1499 = vunpack.c.l.b16 %v1409
    %v1500 = vunpack.c.h.b16 %v1409
    %v1501 = vunpack.c.l.b16 %v1410
    %v1502 = vunpack.c.h.b16 %v1410
    %v1503 = vunpack.c.l.b16 %v1411
    %v1504 = vunpack.c.h.b16 %v1411
    %v1505 = vunpack.c.l.b16 %v1412
    %v1506 = vunpack.c.h.b16 %v1412
    %v1507 = vunpack.c.l.b16 %v1413
    %v1508 = vunpack.c.h.b16 %v1413
    %v1509 = vunpack.c.l.b16 %v1414
    %v1510 = vunpack.c.h.b16 %v1414
    %v1511 = vpack.c.b16 %v1451, %v1447
    %v1512 = vpack.c.b16 %v1452, %v1448
    %v1513 = vpack.c.b16 %v1453, %v1449
    %v1514 = vpack.c.b16 %v1454, %v1450
    %v1515 = vpack.c.b16 %v1459, %v1455
    %v1516 = vpack.c.b16 %v1460, %v1456
    %v1517 = vpack.c.b16 %v1461, %v1457
    %v1518 = vpack.c.b16 %v1462, %v1458
    %v1519 = vpack.c.b16 %v1467, %v1463
    %v1520 = vpack.c.b16 %v1468, %v1464
    %v1521 = vpack.c.b16 %v1469, %v1465
    %v1522 = vpack.c.b16 %v1470, %v1466
    %v1523 = vpack.c.b16 %v1475, %v1471
    %v1524 = vpack.c.b16 %v1476, %v1472
    %v1525 = vpack.c.b16 %v1477, %v1473
    %v1526 = vpack.c.b16 %v1478, %v1474
    %v1527 = vpack.c.b16 %v1483, %v1479
    %v1528 = vpack.c.b16 %v1484, %v1480
    %v1529 = vpack.c.b16 %v1485, %v1481
    %v1530 = vpack.c.b16 %v1486, %v1482
    %v1531 = vpack.c.b16 %v1491, %v1487
    %v1532 = vpack.c.b16 %v1492, %v1488
    %v1533 = vpack.c.b16 %v1493, %v1489
    %v1534 = vpack.c.b16 %v1494, %v1490
    %v1535 = vpack.c.b16 %v1499, %v1495
    %v1536 = vpack.c.b16 %v1500, %v1496
    %v1537 = vpack.c.b16 %v1501, %v1497
    %v1538 = vpack.c.b16 %v1502, %v1498
    %v1539 = vpack.c.b16 %v1507, %v1503
    %v1540 = vpack.c.b16 %v1508, %v1504
    %v1541 = vpack.c.b16 %v1509, %v1505
    %v1542 = vpack.c.b16 %v1510, %v1506
    %1575 = vmatpush.bf16.msra.mxu0 %v1539
    %1576 = vmatpush.bf16.msra.mxu0 %v1535
    %1577 = vmatpush.bf16.msra.mxu0 %v1531
    %1578 = vmatpush.bf16.msra.mxu0 %v1527
    %1579 = vmatpush.bf16.msra.mxu0 %v1523
    %1580 = vmatpush.bf16.msra.mxu0 %v1519
    %1581 = vmatpush.bf16.msra.mxu0 %v1515
    %1582 = vmatpush.bf16.msra.mxu0 %v1511
    %1583 = vmatmul.bf16.gmra.mxu0 %v1382
    %v1584 = vpop.f32.mrf.mxu0
    %v1585 = vadd.f32 0.0, %v1584
    %v1586 = vpop.f32.mrf.mxu0
    %1587 = vdwg.mxu0
    %1588 = vmatpush.bf16.msra.mxu0 %v1540
    %1589 = vmatpush.bf16.msra.mxu0 %v1536
    %1590 = vmatpush.bf16.msra.mxu0 %v1532
    %1591 = vmatpush.bf16.msra.mxu0 %v1528
    %1592 = vmatpush.bf16.msra.mxu0 %v1524
    %1593 = vmatpush.bf16.msra.mxu0 %v1520
    %1594 = vmatpush.bf16.msra.mxu0 %v1516
    %1595 = vmatpush.bf16.msra.mxu0 %v1512
    %1596 = vmatmul.bf16.gmra.mxu0 %v1382
    %v1597 = vpop.f32.mrf.mxu0
    %v1598 = vadd.f32 0.0, %v1597
    %v1599 = vpop.f32.mrf.mxu0
    %1600 = vdwg.mxu0
    %1601 = vmatpush.bf16.msra.mxu0 %v1541
    %1602 = vmatpush.bf16.msra.mxu0 %v1537
    %1603 = vmatpush.bf16.msra.mxu0 %v1533
    %1604 = vmatpush.bf16.msra.mxu0 %v1529
    %1605 = vmatpush.bf16.msra.mxu0 %v1525
    %1606 = vmatpush.bf16.msra.mxu0 %v1521
    %1607 = vmatpush.bf16.msra.mxu0 %v1517
    %1608 = vmatpush.bf16.msra.mxu0 %v1513
    %1609 = vmatmul.bf16.gmra.mxu0 %v1382
    %v1610 = vpop.f32.mrf.mxu0
    %v1611 = vadd.f32 0.0, %v1610
    %v1612 = vpop.f32.mrf.mxu0
    %1613 = vdwg.mxu0
    %1614 = vmatpush.bf16.msra.mxu0 %v1542
    %1615 = vmatpush.bf16.msra.mxu0 %v1538
    %1616 = vmatpush.bf16.msra.mxu0 %v1534
    %1617 = vmatpush.bf16.msra.mxu0 %v1530
    %1618 = vmatpush.bf16.msra.mxu0 %v1526
    %1619 = vmatpush.bf16.msra.mxu0 %v1522
    %1620 = vmatpush.bf16.msra.mxu0 %v1518
    %1621 = vmatpush.bf16.msra.mxu0 %v1514
    %1622 = vmatmul.bf16.gmra.mxu0 %v1382
    %v1623 = vpop.f32.mrf.mxu0
    %v1624 = vadd.f32 0.0, %v1623
    %v1625 = vpop.f32.mrf.mxu0
    %1626 = vdwg.mxu0
    %v1631 = vrot.slane %v1598, 6
    %v1632 = vrot.slane %v1611, 4
    %v1633 = vrot.slane %v1624, 2
    %v1634 = vsel %vm308, %v1585, %v1631
    %v1635 = vsel %vm310, %v1632, %v1633
    %v1636 = vsel %vm312, %v1634, %v1635
    %v1638 = vadd.f32 %v1381, %v1636
    %v1639 = vxor.u32 %v1638, 2147483648
    %v1640 = vmul.f32 %v1639, 1.442695
    %v1641 = vpow.pop %v1640
    %v1642 = vadd.f32 %v1641, 1.0
    %v1643 = vrcp.pop %v1642
    %v1644 = vmul.f32 %v1642, %v1643
    %v1645 = vsub.f32 1.0, %v1644
    %v1646 = vmul.f32 %v1643, %v1645
    %v1647 = vadd.f32 %v1643, %v1646
    %vm1648 = vweird.f32 %v1642
    %vm1649 = vweird.f32 %v1643
    %vm1650 = vmor %vm1648, %vm1649
    %v1651 = vsel %vm1650, %v1643, %v1647
    %v1652 = vand.u32 2147483647, %v1642
    %vm1653 = vcmp.eq.f32.partialorder %v1652, 8.507059e+37
    %v1654 = vand.u32 %v1642, 2147483648
    %v1655 = vor.u32 1.1754944e-38, %v1654
    %v1656 = vsel %vm1653, %v1655, %v1651
    %v1657 = vmul.f32 1.0, %v1656
    %v1659 = vrot.slane %v1638, 2
    %v1661 = vxor.u32 %v1659, 2147483648
    %v1662 = vmul.f32 %v1661, 1.442695
    %v1663 = vpow.pop %v1662
    %v1664 = vadd.f32 %v1663, 1.0
    %v1665 = vrcp.pop %v1664
    %v1666 = vmul.f32 %v1664, %v1665
    %v1667 = vsub.f32 1.0, %v1666
    %v1668 = vmul.f32 %v1665, %v1667
    %v1669 = vadd.f32 %v1665, %v1668
    %vm1670 = vweird.f32 %v1664
    %vm1671 = vweird.f32 %v1665
    %vm1672 = vmor %vm1670, %vm1671
    %v1673 = vsel %vm1672, %v1665, %v1669
    %v1674 = vand.u32 2147483647, %v1664
    %vm1675 = vcmp.eq.f32.partialorder %v1674, 8.507059e+37
    %v1676 = vand.u32 %v1664, 2147483648
    %v1677 = vor.u32 1.1754944e-38, %v1676
    %v1678 = vsel %vm1675, %v1677, %v1673
    %v1679 = vmul.f32 1.0, %v1678
    %v1680 = vrot.slane %v1638, 4
    %v1682 = vtanh.pop %v1680
    %v1683 = vrot.slane %v1638, 6
    %v1685 = vxor.u32 %v1683, 2147483648
    %v1686 = vmul.f32 %v1685, 1.442695
    %v1687 = vpow.pop %v1686
    %v1688 = vadd.f32 %v1687, 1.0
    %v1689 = vrcp.pop %v1688
    %v1690 = vmul.f32 %v1688, %v1689
    %v1691 = vsub.f32 1.0, %v1690
    %v1692 = vmul.f32 %v1689, %v1691
    %v1693 = vadd.f32 %v1689, %v1692
    %vm1694 = vweird.f32 %v1688
    %vm1695 = vweird.f32 %v1689
    %vm1696 = vmor %vm1694, %vm1695
    %v1697 = vsel %vm1696, %v1689, %v1693
    %v1698 = vand.u32 2147483647, %v1688
    %vm1699 = vcmp.eq.f32.partialorder %v1698, 8.507059e+37
    %v1700 = vand.u32 %v1688, 2147483648
    %v1701 = vor.u32 1.1754944e-38, %v1700
    %v1702 = vsel %vm1699, %v1701, %v1697
    %v1703 = vmul.f32 1.0, %v1702
    %v1704 = vmul.f32 %v1679, %v1375
    %v1705 = vmul.f32 %v1657, %v1682
    %v1706 = vadd.f32 %v1704, %v1705
    %v1707 = vtanh.pop %v1706
    %v1708 = vmul.f32 %v1703, %v1707
    %s1709 = scalar_lea.vmem [#allocation9], 8
    %1710 = vst [vmem:[%s1709] sm:$0x3] %v1708
    %s1711 = scalar_lea.vmem [#allocation4], 40
    %v1712 = vld [vmem:[%s1711] sm:$0xff]
    %v1713 = vpack.c.bf16 %v1708, %v1708
    %v1714 = vld [vmem:[#allocation7] sm:$0xff]
    %v1715 = vld [vmem:[#allocation7 + $0x8] sm:$0xff]
    %v1716 = vld [vmem:[#allocation7 + $0x10] sm:$0xff]
    %v1717 = vld [vmem:[#allocation7 + $0x18] sm:$0xff]
    %v1718 = vld [vmem:[#allocation7 + $0x20] sm:$0xff]
    %v1719 = vld [vmem:[#allocation7 + $0x28] sm:$0xff]
    %v1720 = vld [vmem:[#allocation7 + $0x30] sm:$0xff]
    %v1721 = vld [vmem:[#allocation7 + $0x38] sm:$0xff]
    %v1722 = vld [vmem:[#allocation7 + $0x40] sm:$0xff]
    %v1723 = vld [vmem:[#allocation7 + $0x48] sm:$0xff]
    %v1724 = vld [vmem:[#allocation7 + $0x50] sm:$0xff]
    %v1725 = vld [vmem:[#allocation7 + $0x58] sm:$0xff]
    %v1726 = vld [vmem:[#allocation7 + $0x60] sm:$0xff]
    %v1727 = vld [vmem:[#allocation7 + $0x68] sm:$0xff]
    %v1728 = vld [vmem:[#allocation7 + $0x70] sm:$0xff]
    %v1729 = vld [vmem:[#allocation7 + $0x78] sm:$0xff]
    %v1730 = vld [vmem:[#allocation7 + $0x80] sm:$0xff]
    %v1731 = vld [vmem:[#allocation7 + $0x88] sm:$0xff]
    %v1732 = vld [vmem:[#allocation7 + $0x90] sm:$0xff]
    %v1733 = vld [vmem:[#allocation7 + $0x98] sm:$0xff]
    %v1734 = vld [vmem:[#allocation7 + $0xa0] sm:$0xff]
    %v1735 = vld [vmem:[#allocation7 + $0xa8] sm:$0xff]
    %v1736 = vld [vmem:[#allocation7 + $0xb0] sm:$0xff]
    %v1737 = vld [vmem:[#allocation7 + $0xb8] sm:$0xff]
    %v1738 = vld [vmem:[#allocation7 + $0xc0] sm:$0xff]
    %v1739 = vld [vmem:[#allocation7 + $0xc8] sm:$0xff]
    %v1740 = vld [vmem:[#allocation7 + $0xd0] sm:$0xff]
    %v1741 = vld [vmem:[#allocation7 + $0xd8] sm:$0xff]
    %v1742 = vld [vmem:[#allocation7 + $0xe0] sm:$0xff]
    %v1743 = vld [vmem:[#allocation7 + $0xe8] sm:$0xff]
    %v1744 = vld [vmem:[#allocation7 + $0xf0] sm:$0xff]
    %v1745 = vld [vmem:[#allocation7 + $0xf8] sm:$0xff]
    %v1778 = vunpack.c.l.b16 %v1714
    %v1779 = vunpack.c.h.b16 %v1714
    %v1780 = vunpack.c.l.b16 %v1715
    %v1781 = vunpack.c.h.b16 %v1715
    %v1782 = vunpack.c.l.b16 %v1716
    %v1783 = vunpack.c.h.b16 %v1716
    %v1784 = vunpack.c.l.b16 %v1717
    %v1785 = vunpack.c.h.b16 %v1717
    %v1786 = vunpack.c.l.b16 %v1718
    %v1787 = vunpack.c.h.b16 %v1718
    %v1788 = vunpack.c.l.b16 %v1719
    %v1789 = vunpack.c.h.b16 %v1719
    %v1790 = vunpack.c.l.b16 %v1720
    %v1791 = vunpack.c.h.b16 %v1720
    %v1792 = vunpack.c.l.b16 %v1721
    %v1793 = vunpack.c.h.b16 %v1721
    %v1794 = vunpack.c.l.b16 %v1722
    %v1795 = vunpack.c.h.b16 %v1722
    %v1796 = vunpack.c.l.b16 %v1723
    %v1797 = vunpack.c.h.b16 %v1723
    %v1798 = vunpack.c.l.b16 %v1724
    %v1799 = vunpack.c.h.b16 %v1724
    %v1800 = vunpack.c.l.b16 %v1725
    %v1801 = vunpack.c.h.b16 %v1725
    %v1802 = vunpack.c.l.b16 %v1726
    %v1803 = vunpack.c.h.b16 %v1726
    %v1804 = vunpack.c.l.b16 %v1727
    %v1805 = vunpack.c.h.b16 %v1727
    %v1806 = vunpack.c.l.b16 %v1728
    %v1807 = vunpack.c.h.b16 %v1728
    %v1808 = vunpack.c.l.b16 %v1729
    %v1809 = vunpack.c.h.b16 %v1729
    %v1810 = vunpack.c.l.b16 %v1730
    %v1811 = vunpack.c.h.b16 %v1730
    %v1812 = vunpack.c.l.b16 %v1731
    %v1813 = vunpack.c.h.b16 %v1731
    %v1814 = vunpack.c.l.b16 %v1732
    %v1815 = vunpack.c.h.b16 %v1732
    %v1816 = vunpack.c.l.b16 %v1733
    %v1817 = vunpack.c.h.b16 %v1733
    %v1818 = vunpack.c.l.b16 %v1734
    %v1819 = vunpack.c.h.b16 %v1734
    %v1820 = vunpack.c.l.b16 %v1735
    %v1821 = vunpack.c.h.b16 %v1735
    %v1822 = vunpack.c.l.b16 %v1736
    %v1823 = vunpack.c.h.b16 %v1736
    %v1824 = vunpack.c.l.b16 %v1737
    %v1825 = vunpack.c.h.b16 %v1737
    %v1826 = vunpack.c.l.b16 %v1738
    %v1827 = vunpack.c.h.b16 %v1738
    %v1828 = vunpack.c.l.b16 %v1739
    %v1829 = vunpack.c.h.b16 %v1739
    %v1830 = vunpack.c.l.b16 %v1740
    %v1831 = vunpack.c.h.b16 %v1740
    %v1832 = vunpack.c.l.b16 %v1741
    %v1833 = vunpack.c.h.b16 %v1741
    %v1834 = vunpack.c.l.b16 %v1742
    %v1835 = vunpack.c.h.b16 %v1742
    %v1836 = vunpack.c.l.b16 %v1743
    %v1837 = vunpack.c.h.b16 %v1743
    %v1838 = vunpack.c.l.b16 %v1744
    %v1839 = vunpack.c.h.b16 %v1744
    %v1840 = vunpack.c.l.b16 %v1745
    %v1841 = vunpack.c.h.b16 %v1745
    %v1842 = vpack.c.b16 %v1782, %v1778
    %v1843 = vpack.c.b16 %v1783, %v1779
    %v1844 = vpack.c.b16 %v1784, %v1780
    %v1845 = vpack.c.b16 %v1785, %v1781
    %v1846 = vpack.c.b16 %v1790, %v1786
    %v1847 = vpack.c.b16 %v1791, %v1787
    %v1848 = vpack.c.b16 %v1792, %v1788
    %v1849 = vpack.c.b16 %v1793, %v1789
    %v1850 = vpack.c.b16 %v1798, %v1794
    %v1851 = vpack.c.b16 %v1799, %v1795
    %v1852 = vpack.c.b16 %v1800, %v1796
    %v1853 = vpack.c.b16 %v1801, %v1797
    %v1854 = vpack.c.b16 %v1806, %v1802
    %v1855 = vpack.c.b16 %v1807, %v1803
    %v1856 = vpack.c.b16 %v1808, %v1804
    %v1857 = vpack.c.b16 %v1809, %v1805
    %v1858 = vpack.c.b16 %v1814, %v1810
    %v1859 = vpack.c.b16 %v1815, %v1811
    %v1860 = vpack.c.b16 %v1816, %v1812
    %v1861 = vpack.c.b16 %v1817, %v1813
    %v1862 = vpack.c.b16 %v1822, %v1818
    %v1863 = vpack.c.b16 %v1823, %v1819
    %v1864 = vpack.c.b16 %v1824, %v1820
    %v1865 = vpack.c.b16 %v1825, %v1821
    %v1866 = vpack.c.b16 %v1830, %v1826
    %v1867 = vpack.c.b16 %v1831, %v1827
    %v1868 = vpack.c.b16 %v1832, %v1828
    %v1869 = vpack.c.b16 %v1833, %v1829
    %v1870 = vpack.c.b16 %v1838, %v1834
    %v1871 = vpack.c.b16 %v1839, %v1835
    %v1872 = vpack.c.b16 %v1840, %v1836
    %v1873 = vpack.c.b16 %v1841, %v1837
    %1906 = vmatpush.bf16.msra.mxu0 %v1870
    %1907 = vmatpush.bf16.msra.mxu0 %v1866
    %1908 = vmatpush.bf16.msra.mxu0 %v1862
    %1909 = vmatpush.bf16.msra.mxu0 %v1858
    %1910 = vmatpush.bf16.msra.mxu0 %v1854
    %1911 = vmatpush.bf16.msra.mxu0 %v1850
    %1912 = vmatpush.bf16.msra.mxu0 %v1846
    %1913 = vmatpush.bf16.msra.mxu0 %v1842
    %1914 = vmatmul.bf16.gmra.mxu0 %v1713
    %v1915 = vpop.f32.mrf.mxu0
    %v1916 = vadd.f32 0.0, %v1915
    %v1917 = vpop.f32.mrf.mxu0
    %1918 = vdwg.mxu0
    %1919 = vmatpush.bf16.msra.mxu0 %v1871
    %1920 = vmatpush.bf16.msra.mxu0 %v1867
    %1921 = vmatpush.bf16.msra.mxu0 %v1863
    %1922 = vmatpush.bf16.msra.mxu0 %v1859
    %1923 = vmatpush.bf16.msra.mxu0 %v1855
    %1924 = vmatpush.bf16.msra.mxu0 %v1851
    %1925 = vmatpush.bf16.msra.mxu0 %v1847
    %1926 = vmatpush.bf16.msra.mxu0 %v1843
    %1927 = vmatmul.bf16.gmra.mxu0 %v1713
    %v1928 = vpop.f32.mrf.mxu0
    %v1929 = vadd.f32 0.0, %v1928
    %v1930 = vpop.f32.mrf.mxu0
    %1931 = vdwg.mxu0
    %1932 = vmatpush.bf16.msra.mxu0 %v1872
    %1933 = vmatpush.bf16.msra.mxu0 %v1868
    %1934 = vmatpush.bf16.msra.mxu0 %v1864
    %1935 = vmatpush.bf16.msra.mxu0 %v1860
    %1936 = vmatpush.bf16.msra.mxu0 %v1856
    %1937 = vmatpush.bf16.msra.mxu0 %v1852
    %1938 = vmatpush.bf16.msra.mxu0 %v1848
    %1939 = vmatpush.bf16.msra.mxu0 %v1844
    %1940 = vmatmul.bf16.gmra.mxu0 %v1713
    %v1941 = vpop.f32.mrf.mxu0
    %v1942 = vadd.f32 0.0, %v1941
    %v1943 = vpop.f32.mrf.mxu0
    %1944 = vdwg.mxu0
    %1945 = vmatpush.bf16.msra.mxu0 %v1873
    %1946 = vmatpush.bf16.msra.mxu0 %v1869
    %1947 = vmatpush.bf16.msra.mxu0 %v1865
    %1948 = vmatpush.bf16.msra.mxu0 %v1861
    %1949 = vmatpush.bf16.msra.mxu0 %v1857
    %1950 = vmatpush.bf16.msra.mxu0 %v1853
    %1951 = vmatpush.bf16.msra.mxu0 %v1849
    %1952 = vmatpush.bf16.msra.mxu0 %v1845
    %1953 = vmatmul.bf16.gmra.mxu0 %v1713
    %v1954 = vpop.f32.mrf.mxu0
    %v1955 = vadd.f32 0.0, %v1954
    %v1956 = vpop.f32.mrf.mxu0
    %1957 = vdwg.mxu0
    %v1962 = vrot.slane %v1929, 6
    %v1963 = vrot.slane %v1942, 4
    %v1964 = vrot.slane %v1955, 2
    %v1965 = vsel %vm308, %v1916, %v1962
    %v1966 = vsel %vm310, %v1963, %v1964
    %v1967 = vsel %vm312, %v1965, %v1966
    %v1969 = vadd.f32 %v1712, %v1967
    %v1970 = vxor.u32 %v1969, 2147483648
    %v1971 = vmul.f32 %v1970, 1.442695
    %v1972 = vpow.pop %v1971
    %v1973 = vadd.f32 %v1972, 1.0
    %v1974 = vrcp.pop %v1973
    %v1975 = vmul.f32 %v1973, %v1974
    %v1976 = vsub.f32 1.0, %v1975
    %v1977 = vmul.f32 %v1974, %v1976
    %v1978 = vadd.f32 %v1974, %v1977
    %vm1979 = vweird.f32 %v1973
    %vm1980 = vweird.f32 %v1974
    %vm1981 = vmor %vm1979, %vm1980
    %v1982 = vsel %vm1981, %v1974, %v1978
    %v1983 = vand.u32 2147483647, %v1973
    %vm1984 = vcmp.eq.f32.partialorder %v1983, 8.507059e+37
    %v1985 = vand.u32 %v1973, 2147483648
    %v1986 = vor.u32 1.1754944e-38, %v1985
    %v1987 = vsel %vm1984, %v1986, %v1982
    %v1988 = vmul.f32 1.0, %v1987
    %v1990 = vrot.slane %v1969, 2
    %v1992 = vxor.u32 %v1990, 2147483648
    %v1993 = vmul.f32 %v1992, 1.442695
    %v1994 = vpow.pop %v1993
    %v1995 = vadd.f32 %v1994, 1.0
    %v1996 = vrcp.pop %v1995
    %v1997 = vmul.f32 %v1995, %v1996
    %v1998 = vsub.f32 1.0, %v1997
    %v1999 = vmul.f32 %v1996, %v1998
    %v2000 = vadd.f32 %v1996, %v1999
    %vm2001 = vweird.f32 %v1995
    %vm2002 = vweird.f32 %v1996
    %vm2003 = vmor %vm2001, %vm2002
    %v2004 = vsel %vm2003, %v1996, %v2000
    %v2005 = vand.u32 2147483647, %v1995
    %vm2006 = vcmp.eq.f32.partialorder %v2005, 8.507059e+37
    %v2007 = vand.u32 %v1995, 2147483648
    %v2008 = vor.u32 1.1754944e-38, %v2007
    %v2009 = vsel %vm2006, %v2008, %v2004
    %v2010 = vmul.f32 1.0, %v2009
    %v2011 = vrot.slane %v1969, 4
    %v2013 = vtanh.pop %v2011
    %v2014 = vrot.slane %v1969, 6
    %v2016 = vxor.u32 %v2014, 2147483648
    %v2017 = vmul.f32 %v2016, 1.442695
    %v2018 = vpow.pop %v2017
    %v2019 = vadd.f32 %v2018, 1.0
    %v2020 = vrcp.pop %v2019
    %v2021 = vmul.f32 %v2019, %v2020
    %v2022 = vsub.f32 1.0, %v2021
    %v2023 = vmul.f32 %v2020, %v2022
    %v2024 = vadd.f32 %v2020, %v2023
    %vm2025 = vweird.f32 %v2019
    %vm2026 = vweird.f32 %v2020
    %vm2027 = vmor %vm2025, %vm2026
    %v2028 = vsel %vm2027, %v2020, %v2024
    %v2029 = vand.u32 2147483647, %v2019
    %vm2030 = vcmp.eq.f32.partialorder %v2029, 8.507059e+37
    %v2031 = vand.u32 %v2019, 2147483648
    %v2032 = vor.u32 1.1754944e-38, %v2031
    %v2033 = vsel %vm2030, %v2032, %v2028
    %v2034 = vmul.f32 1.0, %v2033
    %v2035 = vmul.f32 %v2010, %v1706
    %v2036 = vmul.f32 %v1988, %v2013
    %v2037 = vadd.f32 %v2035, %v2036
    %v2038 = vtanh.pop %v2037
    %v2039 = vmul.f32 %v2034, %v2038
    %s2040 = scalar_lea.vmem [#allocation9], 10
    %2041 = vst [vmem:[%s2040] sm:$0x3] %v2039
    %s2042 = scalar_lea.vmem [#allocation4], 48
    %v2043 = vld [vmem:[%s2042] sm:$0xff]
    %v2044 = vpack.c.bf16 %v2039, %v2039
    %v2045 = vld [vmem:[#allocation7] sm:$0xff]
    %v2046 = vld [vmem:[#allocation7 + $0x8] sm:$0xff]
    %v2047 = vld [vmem:[#allocation7 + $0x10] sm:$0xff]
    %v2048 = vld [vmem:[#allocation7 + $0x18] sm:$0xff]
    %v2049 = vld [vmem:[#allocation7 + $0x20] sm:$0xff]
    %v2050 = vld [vmem:[#allocation7 + $0x28] sm:$0xff]
    %v2051 = vld [vmem:[#allocation7 + $0x30] sm:$0xff]
    %v2052 = vld [vmem:[#allocation7 + $0x38] sm:$0xff]
    %v2053 = vld [vmem:[#allocation7 + $0x40] sm:$0xff]
    %v2054 = vld [vmem:[#allocation7 + $0x48] sm:$0xff]
    %v2055 = vld [vmem:[#allocation7 + $0x50] sm:$0xff]
    %v2056 = vld [vmem:[#allocation7 + $0x58] sm:$0xff]
    %v2057 = vld [vmem:[#allocation7 + $0x60] sm:$0xff]
    %v2058 = vld [vmem:[#allocation7 + $0x68] sm:$0xff]
    %v2059 = vld [vmem:[#allocation7 + $0x70] sm:$0xff]
    %v2060 = vld [vmem:[#allocation7 + $0x78] sm:$0xff]
    %v2061 = vld [vmem:[#allocation7 + $0x80] sm:$0xff]
    %v2062 = vld [vmem:[#allocation7 + $0x88] sm:$0xff]
    %v2063 = vld [vmem:[#allocation7 + $0x90] sm:$0xff]
    %v2064 = vld [vmem:[#allocation7 + $0x98] sm:$0xff]
    %v2065 = vld [vmem:[#allocation7 + $0xa0] sm:$0xff]
    %v2066 = vld [vmem:[#allocation7 + $0xa8] sm:$0xff]
    %v2067 = vld [vmem:[#allocation7 + $0xb0] sm:$0xff]
    %v2068 = vld [vmem:[#allocation7 + $0xb8] sm:$0xff]
    %v2069 = vld [vmem:[#allocation7 + $0xc0] sm:$0xff]
    %v2070 = vld [vmem:[#allocation7 + $0xc8] sm:$0xff]
    %v2071 = vld [vmem:[#allocation7 + $0xd0] sm:$0xff]
    %v2072 = vld [vmem:[#allocation7 + $0xd8] sm:$0xff]
    %v2073 = vld [vmem:[#allocation7 + $0xe0] sm:$0xff]
    %v2074 = vld [vmem:[#allocation7 + $0xe8] sm:$0xff]
    %v2075 = vld [vmem:[#allocation7 + $0xf0] sm:$0xff]
    %v2076 = vld [vmem:[#allocation7 + $0xf8] sm:$0xff]
    %v2109 = vunpack.c.l.b16 %v2045
    %v2110 = vunpack.c.h.b16 %v2045
    %v2111 = vunpack.c.l.b16 %v2046
    %v2112 = vunpack.c.h.b16 %v2046
    %v2113 = vunpack.c.l.b16 %v2047
    %v2114 = vunpack.c.h.b16 %v2047
    %v2115 = vunpack.c.l.b16 %v2048
    %v2116 = vunpack.c.h.b16 %v2048
    %v2117 = vunpack.c.l.b16 %v2049
    %v2118 = vunpack.c.h.b16 %v2049
    %v2119 = vunpack.c.l.b16 %v2050
    %v2120 = vunpack.c.h.b16 %v2050
    %v2121 = vunpack.c.l.b16 %v2051
    %v2122 = vunpack.c.h.b16 %v2051
    %v2123 = vunpack.c.l.b16 %v2052
    %v2124 = vunpack.c.h.b16 %v2052
    %v2125 = vunpack.c.l.b16 %v2053
    %v2126 = vunpack.c.h.b16 %v2053
    %v2127 = vunpack.c.l.b16 %v2054
    %v2128 = vunpack.c.h.b16 %v2054
    %v2129 = vunpack.c.l.b16 %v2055
    %v2130 = vunpack.c.h.b16 %v2055
    %v2131 = vunpack.c.l.b16 %v2056
    %v2132 = vunpack.c.h.b16 %v2056
    %v2133 = vunpack.c.l.b16 %v2057
    %v2134 = vunpack.c.h.b16 %v2057
    %v2135 = vunpack.c.l.b16 %v2058
    %v2136 = vunpack.c.h.b16 %v2058
    %v2137 = vunpack.c.l.b16 %v2059
    %v2138 = vunpack.c.h.b16 %v2059
    %v2139 = vunpack.c.l.b16 %v2060
    %v2140 = vunpack.c.h.b16 %v2060
    %v2141 = vunpack.c.l.b16 %v2061
    %v2142 = vunpack.c.h.b16 %v2061
    %v2143 = vunpack.c.l.b16 %v2062
    %v2144 = vunpack.c.h.b16 %v2062
    %v2145 = vunpack.c.l.b16 %v2063
    %v2146 = vunpack.c.h.b16 %v2063
    %v2147 = vunpack.c.l.b16 %v2064
    %v2148 = vunpack.c.h.b16 %v2064
    %v2149 = vunpack.c.l.b16 %v2065
    %v2150 = vunpack.c.h.b16 %v2065
    %v2151 = vunpack.c.l.b16 %v2066
    %v2152 = vunpack.c.h.b16 %v2066
    %v2153 = vunpack.c.l.b16 %v2067
    %v2154 = vunpack.c.h.b16 %v2067
    %v2155 = vunpack.c.l.b16 %v2068
    %v2156 = vunpack.c.h.b16 %v2068
    %v2157 = vunpack.c.l.b16 %v2069
    %v2158 = vunpack.c.h.b16 %v2069
    %v2159 = vunpack.c.l.b16 %v2070
    %v2160 = vunpack.c.h.b16 %v2070
    %v2161 = vunpack.c.l.b16 %v2071
    %v2162 = vunpack.c.h.b16 %v2071
    %v2163 = vunpack.c.l.b16 %v2072
    %v2164 = vunpack.c.h.b16 %v2072
    %v2165 = vunpack.c.l.b16 %v2073
    %v2166 = vunpack.c.h.b16 %v2073
    %v2167 = vunpack.c.l.b16 %v2074
    %v2168 = vunpack.c.h.b16 %v2074
    %v2169 = vunpack.c.l.b16 %v2075
    %v2170 = vunpack.c.h.b16 %v2075
    %v2171 = vunpack.c.l.b16 %v2076
    %v2172 = vunpack.c.h.b16 %v2076
    %v2173 = vpack.c.b16 %v2113, %v2109
    %v2174 = vpack.c.b16 %v2114, %v2110
    %v2175 = vpack.c.b16 %v2115, %v2111
    %v2176 = vpack.c.b16 %v2116, %v2112
    %v2177 = vpack.c.b16 %v2121, %v2117
    %v2178 = vpack.c.b16 %v2122, %v2118
    %v2179 = vpack.c.b16 %v2123, %v2119
    %v2180 = vpack.c.b16 %v2124, %v2120
    %v2181 = vpack.c.b16 %v2129, %v2125
    %v2182 = vpack.c.b16 %v2130, %v2126
    %v2183 = vpack.c.b16 %v2131, %v2127
    %v2184 = vpack.c.b16 %v2132, %v2128
    %v2185 = vpack.c.b16 %v2137, %v2133
    %v2186 = vpack.c.b16 %v2138, %v2134
    %v2187 = vpack.c.b16 %v2139, %v2135
    %v2188 = vpack.c.b16 %v2140, %v2136
    %v2189 = vpack.c.b16 %v2145, %v2141
    %v2190 = vpack.c.b16 %v2146, %v2142
    %v2191 = vpack.c.b16 %v2147, %v2143
    %v2192 = vpack.c.b16 %v2148, %v2144
    %v2193 = vpack.c.b16 %v2153, %v2149
    %v2194 = vpack.c.b16 %v2154, %v2150
    %v2195 = vpack.c.b16 %v2155, %v2151
    %v2196 = vpack.c.b16 %v2156, %v2152
    %v2197 = vpack.c.b16 %v2161, %v2157
    %v2198 = vpack.c.b16 %v2162, %v2158
    %v2199 = vpack.c.b16 %v2163, %v2159
    %v2200 = vpack.c.b16 %v2164, %v2160
    %v2201 = vpack.c.b16 %v2169, %v2165
    %v2202 = vpack.c.b16 %v2170, %v2166
    %v2203 = vpack.c.b16 %v2171, %v2167
    %v2204 = vpack.c.b16 %v2172, %v2168
    %2237 = vmatpush.bf16.msra.mxu0 %v2201
    %2238 = vmatpush.bf16.msra.mxu0 %v2197
    %2239 = vmatpush.bf16.msra.mxu0 %v2193
    %2240 = vmatpush.bf16.msra.mxu0 %v2189
    %2241 = vmatpush.bf16.msra.mxu0 %v2185
    %2242 = vmatpush.bf16.msra.mxu0 %v2181
    %2243 = vmatpush.bf16.msra.mxu0 %v2177
    %2244 = vmatpush.bf16.msra.mxu0 %v2173
    %2245 = vmatmul.bf16.gmra.mxu0 %v2044
    %v2246 = vpop.f32.mrf.mxu0
    %v2247 = vadd.f32 0.0, %v2246
    %v2248 = vpop.f32.mrf.mxu0
    %2249 = vdwg.mxu0
    %2250 = vmatpush.bf16.msra.mxu0 %v2202
    %2251 = vmatpush.bf16.msra.mxu0 %v2198
    %2252 = vmatpush.bf16.msra.mxu0 %v2194
    %2253 = vmatpush.bf16.msra.mxu0 %v2190
    %2254 = vmatpush.bf16.msra.mxu0 %v2186
    %2255 = vmatpush.bf16.msra.mxu0 %v2182
    %2256 = vmatpush.bf16.msra.mxu0 %v2178
    %2257 = vmatpush.bf16.msra.mxu0 %v2174
    %2258 = vmatmul.bf16.gmra.mxu0 %v2044
    %v2259 = vpop.f32.mrf.mxu0
    %v2260 = vadd.f32 0.0, %v2259
    %v2261 = vpop.f32.mrf.mxu0
    %2262 = vdwg.mxu0
    %2263 = vmatpush.bf16.msra.mxu0 %v2203
    %2264 = vmatpush.bf16.msra.mxu0 %v2199
    %2265 = vmatpush.bf16.msra.mxu0 %v2195
    %2266 = vmatpush.bf16.msra.mxu0 %v2191
    %2267 = vmatpush.bf16.msra.mxu0 %v2187
    %2268 = vmatpush.bf16.msra.mxu0 %v2183
    %2269 = vmatpush.bf16.msra.mxu0 %v2179
    %2270 = vmatpush.bf16.msra.mxu0 %v2175
    %2271 = vmatmul.bf16.gmra.mxu0 %v2044
    %v2272 = vpop.f32.mrf.mxu0
    %v2273 = vadd.f32 0.0, %v2272
    %v2274 = vpop.f32.mrf.mxu0
    %2275 = vdwg.mxu0
    %2276 = vmatpush.bf16.msra.mxu0 %v2204
    %2277 = vmatpush.bf16.msra.mxu0 %v2200
    %2278 = vmatpush.bf16.msra.mxu0 %v2196
    %2279 = vmatpush.bf16.msra.mxu0 %v2192
    %2280 = vmatpush.bf16.msra.mxu0 %v2188
    %2281 = vmatpush.bf16.msra.mxu0 %v2184
    %2282 = vmatpush.bf16.msra.mxu0 %v2180
    %2283 = vmatpush.bf16.msra.mxu0 %v2176
    %2284 = vmatmul.bf16.gmra.mxu0 %v2044
    %v2285 = vpop.f32.mrf.mxu0
    %v2286 = vadd.f32 0.0, %v2285
    %v2287 = vpop.f32.mrf.mxu0
    %2288 = vdwg.mxu0
    %v2293 = vrot.slane %v2260, 6
    %v2294 = vrot.slane %v2273, 4
    %v2295 = vrot.slane %v2286, 2
    %v2296 = vsel %vm308, %v2247, %v2293
    %v2297 = vsel %vm310, %v2294, %v2295
    %v2298 = vsel %vm312, %v2296, %v2297
    %v2300 = vadd.f32 %v2043, %v2298
    %v2301 = vxor.u32 %v2300, 2147483648
    %v2302 = vmul.f32 %v2301, 1.442695
    %v2303 = vpow.pop %v2302
    %v2304 = vadd.f32 %v2303, 1.0
    %v2305 = vrcp.pop %v2304
    %v2306 = vmul.f32 %v2304, %v2305
    %v2307 = vsub.f32 1.0, %v2306
    %v2308 = vmul.f32 %v2305, %v2307
    %v2309 = vadd.f32 %v2305, %v2308
    %vm2310 = vweird.f32 %v2304
    %vm2311 = vweird.f32 %v2305
    %vm2312 = vmor %vm2310, %vm2311
    %v2313 = vsel %vm2312, %v2305, %v2309
    %v2314 = vand.u32 2147483647, %v2304
    %vm2315 = vcmp.eq.f32.partialorder %v2314, 8.507059e+37
    %v2316 = vand.u32 %v2304, 2147483648
    %v2317 = vor.u32 1.1754944e-38, %v2316
    %v2318 = vsel %vm2315, %v2317, %v2313
    %v2319 = vmul.f32 1.0, %v2318
    %v2321 = vrot.slane %v2300, 2
    %v2323 = vxor.u32 %v2321, 2147483648
    %v2324 = vmul.f32 %v2323, 1.442695
    %v2325 = vpow.pop %v2324
    %v2326 = vadd.f32 %v2325, 1.0
    %v2327 = vrcp.pop %v2326
    %v2328 = vmul.f32 %v2326, %v2327
    %v2329 = vsub.f32 1.0, %v2328
    %v2330 = vmul.f32 %v2327, %v2329
    %v2331 = vadd.f32 %v2327, %v2330
    %vm2332 = vweird.f32 %v2326
    %vm2333 = vweird.f32 %v2327
    %vm2334 = vmor %vm2332, %vm2333
    %v2335 = vsel %vm2334, %v2327, %v2331
    %v2336 = vand.u32 2147483647, %v2326
    %vm2337 = vcmp.eq.f32.partialorder %v2336, 8.507059e+37
    %v2338 = vand.u32 %v2326, 2147483648
    %v2339 = vor.u32 1.1754944e-38, %v2338
    %v2340 = vsel %vm2337, %v2339, %v2335
    %v2341 = vmul.f32 1.0, %v2340
    %v2342 = vrot.slane %v2300, 4
    %v2344 = vtanh.pop %v2342
    %v2345 = vrot.slane %v2300, 6
    %v2347 = vxor.u32 %v2345, 2147483648
    %v2348 = vmul.f32 %v2347, 1.442695
    %v2349 = vpow.pop %v2348
    %v2350 = vadd.f32 %v2349, 1.0
    %v2351 = vrcp.pop %v2350
    %v2352 = vmul.f32 %v2350, %v2351
    %v2353 = vsub.f32 1.0, %v2352
    %v2354 = vmul.f32 %v2351, %v2353
    %v2355 = vadd.f32 %v2351, %v2354
    %vm2356 = vweird.f32 %v2350
    %vm2357 = vweird.f32 %v2351
    %vm2358 = vmor %vm2356, %vm2357
    %v2359 = vsel %vm2358, %v2351, %v2355
    %v2360 = vand.u32 2147483647, %v2350
    %vm2361 = vcmp.eq.f32.partialorder %v2360, 8.507059e+37
    %v2362 = vand.u32 %v2350, 2147483648
    %v2363 = vor.u32 1.1754944e-38, %v2362
    %v2364 = vsel %vm2361, %v2363, %v2359
    %v2365 = vmul.f32 1.0, %v2364
    %v2366 = vmul.f32 %v2341, %v2037
    %v2367 = vmul.f32 %v2319, %v2344
    %v2368 = vadd.f32 %v2366, %v2367
    %v2369 = vtanh.pop %v2368
    %v2370 = vmul.f32 %v2365, %v2369
    %s2371 = scalar_lea.vmem [#allocation9], 12
    %2372 = vst [vmem:[%s2371] sm:$0x3] %v2370
    %s2373 = scalar_lea.vmem [#allocation4], 56
    %v2374 = vld [vmem:[%s2373] sm:$0xff]
    %v2375 = vpack.c.bf16 %v2370, %v2370
    %v2376 = vld [vmem:[#allocation7] sm:$0xff]
    %v2377 = vld [vmem:[#allocation7 + $0x8] sm:$0xff]
    %v2378 = vld [vmem:[#allocation7 + $0x10] sm:$0xff]
    %v2379 = vld [vmem:[#allocation7 + $0x18] sm:$0xff]
    %v2380 = vld [vmem:[#allocation7 + $0x20] sm:$0xff]
    %v2381 = vld [vmem:[#allocation7 + $0x28] sm:$0xff]
    %v2382 = vld [vmem:[#allocation7 + $0x30] sm:$0xff]
    %v2383 = vld [vmem:[#allocation7 + $0x38] sm:$0xff]
    %v2384 = vld [vmem:[#allocation7 + $0x40] sm:$0xff]
    %v2385 = vld [vmem:[#allocation7 + $0x48] sm:$0xff]
    %v2386 = vld [vmem:[#allocation7 + $0x50] sm:$0xff]
    %v2387 = vld [vmem:[#allocation7 + $0x58] sm:$0xff]
    %v2388 = vld [vmem:[#allocation7 + $0x60] sm:$0xff]
    %v2389 = vld [vmem:[#allocation7 + $0x68] sm:$0xff]
    %v2390 = vld [vmem:[#allocation7 + $0x70] sm:$0xff]
    %v2391 = vld [vmem:[#allocation7 + $0x78] sm:$0xff]
    %v2392 = vld [vmem:[#allocation7 + $0x80] sm:$0xff]
    %v2393 = vld [vmem:[#allocation7 + $0x88] sm:$0xff]
    %v2394 = vld [vmem:[#allocation7 + $0x90] sm:$0xff]
    %v2395 = vld [vmem:[#allocation7 + $0x98] sm:$0xff]
    %v2396 = vld [vmem:[#allocation7 + $0xa0] sm:$0xff]
    %v2397 = vld [vmem:[#allocation7 + $0xa8] sm:$0xff]
    %v2398 = vld [vmem:[#allocation7 + $0xb0] sm:$0xff]
    %v2399 = vld [vmem:[#allocation7 + $0xb8] sm:$0xff]
    %v2400 = vld [vmem:[#allocation7 + $0xc0] sm:$0xff]
    %v2401 = vld [vmem:[#allocation7 + $0xc8] sm:$0xff]
    %v2402 = vld [vmem:[#allocation7 + $0xd0] sm:$0xff]
    %v2403 = vld [vmem:[#allocation7 + $0xd8] sm:$0xff]
    %v2404 = vld [vmem:[#allocation7 + $0xe0] sm:$0xff]
    %v2405 = vld [vmem:[#allocation7 + $0xe8] sm:$0xff]
    %v2406 = vld [vmem:[#allocation7 + $0xf0] sm:$0xff]
    %v2407 = vld [vmem:[#allocation7 + $0xf8] sm:$0xff]
    %v2440 = vunpack.c.l.b16 %v2376
    %v2441 = vunpack.c.h.b16 %v2376
    %v2442 = vunpack.c.l.b16 %v2377
    %v2443 = vunpack.c.h.b16 %v2377
    %v2444 = vunpack.c.l.b16 %v2378
    %v2445 = vunpack.c.h.b16 %v2378
    %v2446 = vunpack.c.l.b16 %v2379
    %v2447 = vunpack.c.h.b16 %v2379
    %v2448 = vunpack.c.l.b16 %v2380
    %v2449 = vunpack.c.h.b16 %v2380
    %v2450 = vunpack.c.l.b16 %v2381
    %v2451 = vunpack.c.h.b16 %v2381
    %v2452 = vunpack.c.l.b16 %v2382
    %v2453 = vunpack.c.h.b16 %v2382
    %v2454 = vunpack.c.l.b16 %v2383
    %v2455 = vunpack.c.h.b16 %v2383
    %v2456 = vunpack.c.l.b16 %v2384
    %v2457 = vunpack.c.h.b16 %v2384
    %v2458 = vunpack.c.l.b16 %v2385
    %v2459 = vunpack.c.h.b16 %v2385
    %v2460 = vunpack.c.l.b16 %v2386
    %v2461 = vunpack.c.h.b16 %v2386
    %v2462 = vunpack.c.l.b16 %v2387
    %v2463 = vunpack.c.h.b16 %v2387
    %v2464 = vunpack.c.l.b16 %v2388
    %v2465 = vunpack.c.h.b16 %v2388
    %v2466 = vunpack.c.l.b16 %v2389
    %v2467 = vunpack.c.h.b16 %v2389
    %v2468 = vunpack.c.l.b16 %v2390
    %v2469 = vunpack.c.h.b16 %v2390
    %v2470 = vunpack.c.l.b16 %v2391
    %v2471 = vunpack.c.h.b16 %v2391
    %v2472 = vunpack.c.l.b16 %v2392
    %v2473 = vunpack.c.h.b16 %v2392
    %v2474 = vunpack.c.l.b16 %v2393
    %v2475 = vunpack.c.h.b16 %v2393
    %v2476 = vunpack.c.l.b16 %v2394
    %v2477 = vunpack.c.h.b16 %v2394
    %v2478 = vunpack.c.l.b16 %v2395
    %v2479 = vunpack.c.h.b16 %v2395
    %v2480 = vunpack.c.l.b16 %v2396
    %v2481 = vunpack.c.h.b16 %v2396
    %v2482 = vunpack.c.l.b16 %v2397
    %v2483 = vunpack.c.h.b16 %v2397
    %v2484 = vunpack.c.l.b16 %v2398
    %v2485 = vunpack.c.h.b16 %v2398
    %v2486 = vunpack.c.l.b16 %v2399
    %v2487 = vunpack.c.h.b16 %v2399
    %v2488 = vunpack.c.l.b16 %v2400
    %v2489 = vunpack.c.h.b16 %v2400
    %v2490 = vunpack.c.l.b16 %v2401
    %v2491 = vunpack.c.h.b16 %v2401
    %v2492 = vunpack.c.l.b16 %v2402
    %v2493 = vunpack.c.h.b16 %v2402
    %v2494 = vunpack.c.l.b16 %v2403
    %v2495 = vunpack.c.h.b16 %v2403
    %v2496 = vunpack.c.l.b16 %v2404
    %v2497 = vunpack.c.h.b16 %v2404
    %v2498 = vunpack.c.l.b16 %v2405
    %v2499 = vunpack.c.h.b16 %v2405
    %v2500 = vunpack.c.l.b16 %v2406
    %v2501 = vunpack.c.h.b16 %v2406
    %v2502 = vunpack.c.l.b16 %v2407
    %v2503 = vunpack.c.h.b16 %v2407
    %v2504 = vpack.c.b16 %v2444, %v2440
    %v2505 = vpack.c.b16 %v2445, %v2441
    %v2506 = vpack.c.b16 %v2446, %v2442
    %v2507 = vpack.c.b16 %v2447, %v2443
    %v2508 = vpack.c.b16 %v2452, %v2448
    %v2509 = vpack.c.b16 %v2453, %v2449
    %v2510 = vpack.c.b16 %v2454, %v2450
    %v2511 = vpack.c.b16 %v2455, %v2451
    %v2512 = vpack.c.b16 %v2460, %v2456
    %v2513 = vpack.c.b16 %v2461, %v2457
    %v2514 = vpack.c.b16 %v2462, %v2458
    %v2515 = vpack.c.b16 %v2463, %v2459
    %v2516 = vpack.c.b16 %v2468, %v2464
    %v2517 = vpack.c.b16 %v2469, %v2465
    %v2518 = vpack.c.b16 %v2470, %v2466
    %v2519 = vpack.c.b16 %v2471, %v2467
    %v2520 = vpack.c.b16 %v2476, %v2472
    %v2521 = vpack.c.b16 %v2477, %v2473
    %v2522 = vpack.c.b16 %v2478, %v2474
    %v2523 = vpack.c.b16 %v2479, %v2475
    %v2524 = vpack.c.b16 %v2484, %v2480
    %v2525 = vpack.c.b16 %v2485, %v2481
    %v2526 = vpack.c.b16 %v2486, %v2482
    %v2527 = vpack.c.b16 %v2487, %v2483
    %v2528 = vpack.c.b16 %v2492, %v2488
    %v2529 = vpack.c.b16 %v2493, %v2489
    %v2530 = vpack.c.b16 %v2494, %v2490
    %v2531 = vpack.c.b16 %v2495, %v2491
    %v2532 = vpack.c.b16 %v2500, %v2496
    %v2533 = vpack.c.b16 %v2501, %v2497
    %v2534 = vpack.c.b16 %v2502, %v2498
    %v2535 = vpack.c.b16 %v2503, %v2499
    %2568 = vmatpush.bf16.msra.mxu0 %v2532
    %2569 = vmatpush.bf16.msra.mxu0 %v2528
    %2570 = vmatpush.bf16.msra.mxu0 %v2524
    %2571 = vmatpush.bf16.msra.mxu0 %v2520
    %2572 = vmatpush.bf16.msra.mxu0 %v2516
    %2573 = vmatpush.bf16.msra.mxu0 %v2512
    %2574 = vmatpush.bf16.msra.mxu0 %v2508
    %2575 = vmatpush.bf16.msra.mxu0 %v2504
    %2576 = vmatmul.bf16.gmra.mxu0 %v2375
    %v2577 = vpop.f32.mrf.mxu0
    %v2578 = vadd.f32 0.0, %v2577
    %v2579 = vpop.f32.mrf.mxu0
    %2580 = vdwg.mxu0
    %2581 = vmatpush.bf16.msra.mxu0 %v2533
    %2582 = vmatpush.bf16.msra.mxu0 %v2529
    %2583 = vmatpush.bf16.msra.mxu0 %v2525
    %2584 = vmatpush.bf16.msra.mxu0 %v2521
    %2585 = vmatpush.bf16.msra.mxu0 %v2517
    %2586 = vmatpush.bf16.msra.mxu0 %v2513
    %2587 = vmatpush.bf16.msra.mxu0 %v2509
    %2588 = vmatpush.bf16.msra.mxu0 %v2505
    %2589 = vmatmul.bf16.gmra.mxu0 %v2375
    %v2590 = vpop.f32.mrf.mxu0
    %v2591 = vadd.f32 0.0, %v2590
    %v2592 = vpop.f32.mrf.mxu0
    %2593 = vdwg.mxu0
    %2594 = vmatpush.bf16.msra.mxu0 %v2534
    %2595 = vmatpush.bf16.msra.mxu0 %v2530
    %2596 = vmatpush.bf16.msra.mxu0 %v2526
    %2597 = vmatpush.bf16.msra.mxu0 %v2522
    %2598 = vmatpush.bf16.msra.mxu0 %v2518
    %2599 = vmatpush.bf16.msra.mxu0 %v2514
    %2600 = vmatpush.bf16.msra.mxu0 %v2510
    %2601 = vmatpush.bf16.msra.mxu0 %v2506
    %2602 = vmatmul.bf16.gmra.mxu0 %v2375
    %v2603 = vpop.f32.mrf.mxu0
    %v2604 = vadd.f32 0.0, %v2603
    %v2605 = vpop.f32.mrf.mxu0
    %2606 = vdwg.mxu0
    %2607 = vmatpush.bf16.msra.mxu0 %v2535
    %2608 = vmatpush.bf16.msra.mxu0 %v2531
    %2609 = vmatpush.bf16.msra.mxu0 %v2527
    %2610 = vmatpush.bf16.msra.mxu0 %v2523
    %2611 = vmatpush.bf16.msra.mxu0 %v2519
    %2612 = vmatpush.bf16.msra.mxu0 %v2515
    %2613 = vmatpush.bf16.msra.mxu0 %v2511
    %2614 = vmatpush.bf16.msra.mxu0 %v2507
    %2615 = vmatmul.bf16.gmra.mxu0 %v2375
    %v2616 = vpop.f32.mrf.mxu0
    %v2617 = vadd.f32 0.0, %v2616
    %v2618 = vpop.f32.mrf.mxu0
    %2619 = vdwg.mxu0
    %v2624 = vrot.slane %v2591, 6
    %v2625 = vrot.slane %v2604, 4
    %v2626 = vrot.slane %v2617, 2
    %v2627 = vsel %vm308, %v2578, %v2624
    %v2628 = vsel %vm310, %v2625, %v2626
    %v2629 = vsel %vm312, %v2627, %v2628
    %v2631 = vadd.f32 %v2374, %v2629
    %v2632 = vxor.u32 %v2631, 2147483648
    %v2633 = vmul.f32 %v2632, 1.442695
    %v2634 = vpow.pop %v2633
    %v2635 = vadd.f32 %v2634, 1.0
    %v2636 = vrcp.pop %v2635
    %v2637 = vmul.f32 %v2635, %v2636
    %v2638 = vsub.f32 1.0, %v2637
    %v2639 = vmul.f32 %v2636, %v2638
    %v2640 = vadd.f32 %v2636, %v2639
    %vm2641 = vweird.f32 %v2635
    %vm2642 = vweird.f32 %v2636
    %vm2643 = vmor %vm2641, %vm2642
    %v2644 = vsel %vm2643, %v2636, %v2640
    %v2645 = vand.u32 2147483647, %v2635
    %vm2646 = vcmp.eq.f32.partialorder %v2645, 8.507059e+37
    %v2647 = vand.u32 %v2635, 2147483648
    %v2648 = vor.u32 1.1754944e-38, %v2647
    %v2649 = vsel %vm2646, %v2648, %v2644
    %v2650 = vmul.f32 1.0, %v2649
    %v2652 = vrot.slane %v2631, 2
    %v2654 = vxor.u32 %v2652, 2147483648
    %v2655 = vmul.f32 %v2654, 1.442695
    %v2656 = vpow.pop %v2655
    %v2657 = vadd.f32 %v2656, 1.0
    %v2658 = vrcp.pop %v2657
    %v2659 = vmul.f32 %v2657, %v2658
    %v2660 = vsub.f32 1.0, %v2659
    %v2661 = vmul.f32 %v2658, %v2660
    %v2662 = vadd.f32 %v2658, %v2661
    %vm2663 = vweird.f32 %v2657
    %vm2664 = vweird.f32 %v2658
    %vm2665 = vmor %vm2663, %vm2664
    %v2666 = vsel %vm2665, %v2658, %v2662
    %v2667 = vand.u32 2147483647, %v2657
    %vm2668 = vcmp.eq.f32.partialorder %v2667, 8.507059e+37
    %v2669 = vand.u32 %v2657, 2147483648
    %v2670 = vor.u32 1.1754944e-38, %v2669
    %v2671 = vsel %vm2668, %v2670, %v2666
    %v2672 = vmul.f32 1.0, %v2671
    %v2673 = vrot.slane %v2631, 4
    %v2675 = vtanh.pop %v2673
    %v2676 = vrot.slane %v2631, 6
    %v2678 = vxor.u32 %v2676, 2147483648
    %v2679 = vmul.f32 %v2678, 1.442695
    %v2680 = vpow.pop %v2679
    %v2681 = vadd.f32 %v2680, 1.0
    %v2682 = vrcp.pop %v2681
    %v2683 = vmul.f32 %v2681, %v2682
    %v2684 = vsub.f32 1.0, %v2683
    %v2685 = vmul.f32 %v2682, %v2684
    %v2686 = vadd.f32 %v2682, %v2685
    %vm2687 = vweird.f32 %v2681
    %vm2688 = vweird.f32 %v2682
    %vm2689 = vmor %vm2687, %vm2688
    %v2690 = vsel %vm2689, %v2682, %v2686
    %v2691 = vand.u32 2147483647, %v2681
    %vm2692 = vcmp.eq.f32.partialorder %v2691, 8.507059e+37
    %v2693 = vand.u32 %v2681, 2147483648
    %v2694 = vor.u32 1.1754944e-38, %v2693
    %v2695 = vsel %vm2692, %v2694, %v2690
    %v2696 = vmul.f32 1.0, %v2695
    %v2697 = vmul.f32 %v2672, %v2368
    %v2698 = vmul.f32 %v2650, %v2675
    %v2699 = vadd.f32 %v2697, %v2698
    %v2700 = vtanh.pop %v2699
    %v2701 = vmul.f32 %v2696, %v2700
    %s2702 = scalar_lea.vmem [#allocation9], 14
    %2703 = vst [vmem:[%s2702] sm:$0x3] %v2701
    %2704 = vst [vmem:[#allocation2] sm:$0x3] %v2701
    %2705 = vst [vmem:[#allocation3] sm:$0x3] %v2699
    // Predicated region
    $region22: #{tpu_custom_call.1} parent=1 // pred_check
      %p2706 = pneg %p47
    $region23: #{tpu_custom_call.1} parent=1 // pred_check_branch
      %2708 = sbr.rel (%p2706) target = $region25
    $region24: #{tpu_custom_call.1} parent=1 // pred_region
      %2709 = vst [vmem:[#allocation10] sm:$0x3] %v2699
    $region25: #{tpu_custom_call.1} parent=1 // pred_fallthru
      _
    // Predicated region
    $region26: #{tpu_custom_call.1} parent=1 // pred_check
      _
    $region27: #{tpu_custom_call.1} parent=1 // pred_check_branch
      %2711 = sbr.rel (0) target = $region29
    $region28: #{tpu_custom_call.1} parent=1 // pred_region
      %2713 = vsyncadd [#allocation6], 0
      %s2714 = sshll.u32 [#allocation9], 4
      %s2715 = int_to_ptr.vmem [resolvable:$true] %s2714
      %s2716 = sshll.u32 %s2, 4
      %s2717 = int_to_ptr.hbm [resolvable:$true] %s2716
      %2722 = dma.vmem_to_hbm [thread:$0]  %s2715, 256, %s2717, [#allocation6], 32, 32, 2
    $region29: #{tpu_custom_call.1} parent=1 // pred_fallthru
      _
    // Predicated region
    $region30: #{tpu_custom_call.1} parent=1 // pred_check
      _
    $region31: #{tpu_custom_call.1} parent=1 // pred_check_branch
      %2724 = sbr.rel (0) target = $region33
    $region32: #{tpu_custom_call.1} parent=1 // pred_region
      %2726 = vsyncadd [#allocation11], 0
      %s2728 = sshll.u32 [#allocation10], 4
      %s2729 = int_to_ptr.vmem [resolvable:$true] %s2728
      %s2730 = sshll.u32 %s3, 4
      %s2731 = int_to_ptr.hbm [resolvable:$true] %s2730
      %2733 = dma.vmem_to_hbm [thread:$0]  %s2729, 32, %s2731, [#allocation11]
    $region33: #{tpu_custom_call.1} parent=1 // pred_fallthru
      _
    // Predicated region
    $region34: #{tpu_custom_call.1} parent=1 // pred_check
      _
    $region35: #{tpu_custom_call.1} parent=1 // pred_check_branch
      %2735 = sbr.rel (0) target = $region37
    $region36: #{tpu_custom_call.1} parent=1 // pred_region
      %2737 = dma.done [#allocation6], 256
    $region37: #{tpu_custom_call.1} parent=1 // pred_fallthru
      _
    // Predicated region
    $region38: #{tpu_custom_call.1} parent=1 // pred_check
      _
    $region39: #{tpu_custom_call.1} parent=1 // pred_check_branch
      %2739 = sbr.rel (0) target = $region41
    $region40: #{tpu_custom_call.1} parent=1 // pred_region
      %2741 = dma.done [#allocation11], 32
    $region41: #{tpu_custom_call.1} parent=1 // pred_fallthru
      _
    %2742 = vsyncpa [#allocation5], 1
    %2743 = vsyncpa [#allocation8], 1
    %2744 = vsyncpa [#allocation6], 1
    %2745 = vsyncpa [#allocation11], 1

</llo_original>
